<compile_context>
chip_gen: v6e
topology: v6e:2x2x1
jax: 0.10.0
libtpu: 0.0.40
codegen_flags: <defaults>
</compile_context>

<pallas_src>
import jax
import jax.numpy as jnp
from jax.experimental import pallas as pl
from jax.experimental.pallas import tpu as pltpu


# ---------------------------------------------------------------------------
# Capability / hardware helpers
# ---------------------------------------------------------------------------

_BUFFERED1_OK = None


def _buffered_single_supported():
    """Probe (once) whether this JAX/Mosaic build supports pl.Buffered(1) on a
    top-level pallas_call BlockSpec, including correct re-fetch when the block
    index changes between grid steps."""
    global _BUFFERED1_OK
    if _BUFFERED1_OK is not None:
        return _BUFFERED1_OK

    def _copy_kernel(x_ref, o_ref):
        o_ref[...] = x_ref[...]

    try:
        x = jnp.arange(16 * 128, dtype=jnp.float32).reshape(16, 128)
        fn = pl.pallas_call(
            _copy_kernel,
            out_shape=jax.ShapeDtypeStruct((16, 128), jnp.float32),
            grid=(2,),
            in_specs=[pl.BlockSpec((8, 128), lambda i: (i, 0),
                                   pipeline_mode=pl.Buffered(1))],
            out_specs=pl.BlockSpec((8, 128), lambda i: (i, 0)),
        )
        y = jax.block_until_ready(fn(x))
        _BUFFERED1_OK = bool(jnp.allclose(y, x))
    except Exception:
        _BUFFERED1_OK = False
    return _BUFFERED1_OK


def _vmem_budget_bytes():
    """~75% of the running generation's per-core VMEM (fallback: 48 MiB).
    Keeps headroom for Mosaic internal scratch, critical on v7x (64 MiB)."""
    try:
        cap = int(pltpu.get_tpu_info().vmem_capacity_bytes)
    except Exception:
        cap = 64 * 1024 * 1024
    return max(int(0.75 * cap), 32 * 1024 * 1024)


def _p8(x):
    return -(-x // 8) * 8


def _p128(x):
    return -(-x // 128) * 128


def _auto_tile_n2(n2p, n1, budget):
    """Largest multiple-of-128 divisor of the padded N2 whose ~6 live f32
    (n1, tile) k-NN temporaries fit in about half of the generation's VMEM
    budget (the other half is left for residents, streamed tiles and the
    double buffers).  Prefers >=256 tiles for the 256-wide MXUs whenever they
    fit."""
    knn_budget = max(budget // 2, 8 * 1024 * 1024)
    cap = max(128, knn_budget // (6 * 4 * _p8(max(n1, 1))))
    best = 128
    t = 128
    while t <= n2p:
        if n2p % t == 0 and t <= cap:
            best = t
        t += 128
    return best


# ---------------------------------------------------------------------------
# Kernel
# ---------------------------------------------------------------------------

def _make_kernel(k, num_layers):
    """Per-(batch, N2-tile) FlowEmbedding kernel. k / layer count are static."""

    def kernel(*refs):
        a1_ref, a2_ref, f1_ref, f2_ref = refs[:4]
        params = refs[4:-1]
        o_ref = refs[-1]

        a1 = a1_ref[...]   # (N1, 8) f32: [x1, y1, z1, |p1|^2, 1, 0, 0, 0]
        a2 = a2_ref[...]   # (8, T)  f32: [-2x2, -2y2, -2z2, 1, |p2|^2, 0, 0, 0]
        f1 = f1_ref[...]   # (C1, N1)  (mxu dtype)
        f2 = f2_ref[...]   # (C2, T)   (mxu dtype)

        # Full squared-distance tile from one canonical MXU matmul (K = 8).
        dd = jnp.dot(a1, a2, preferred_element_type=jnp.float32)   # (N1, T)

        # Iterative k-nearest selection on squared distances (same argmin
        # ordering as true distances).  Per neighbour: one sublane-min reduce,
        # one compare and two selects on the (N1, T) tile; sqrt / reciprocal
        # only touch the (1, T) minima and go to the EUP.
        # NOTE: exact-duplicate distances are all selected in one iteration
        # rather than by smallest index as top_k would; for distinct distances
        # the result is identical.
        wmat = jnp.zeros_like(dd)
        big = jnp.float32(3.0e38)
        for _ in range(k):
            mn = jnp.min(dd, axis=0, keepdims=True)            # (1, T)
            dist = jnp.sqrt(jnp.maximum(mn, 0.0))               # true min dist
            inv = pl.reciprocal(dist + 1e-10, approx=True)      # EUP slot
            sel = dd <= mn                                      # (N1, T)
            wmat = jnp.where(sel, inv, wmat)
            dd = jnp.where(sel, big, dd)

        # Weighted neighbour-feature aggregation on the MXU, then normalise
        # with a (1, T) reciprocal AFTER the matmul (no full-matrix scaling).
        new_f = jnp.dot(f1, wmat.astype(f1.dtype),
                        preferred_element_type=jnp.float32)     # (C1, T)
        rsum = jnp.sum(wmat, axis=0, keepdims=True)             # (1, T)
        new_f = new_f * pl.reciprocal(rsum, approx=True)

        # MLP layer 0; the conv input is concat([new_f, f2], axis=0) -- the
        # first weight is split in the wrapper instead of concatenating here.
        w0a, w0b, b0 = params[0], params[1], params[2]
        x = (jnp.dot(w0a[...], new_f.astype(w0a.dtype),
                     preferred_element_type=jnp.float32)
             + jnp.dot(w0b[...], f2, preferred_element_type=jnp.float32)
             + b0[...])
        x = jnp.maximum(x, 0.0)

        p = 3
        for _ in range(num_layers - 1):
            w, b = params[p], params[p + 1]
            p += 2
            x = jnp.dot(w[...], x.astype(w.dtype),
                        preferred_element_type=jnp.float32) + b[...]
            x = jnp.maximum(x, 0.0)

        o_ref[...] = x.astype(o_ref.dtype)   # (C_out, T): lane-dense store

    return kernel


# ---------------------------------------------------------------------------
# Wrapper
# ---------------------------------------------------------------------------

def flow_embedding(points1, points2, features1, features2, params, k,
                   *, tile_n2=None, mxu_dtype=jnp.float32):
    """FlowEmbedding forward.

    points*:   (B, 3, N)  float32  (PyTorch layout)
    features*: (B, C, N)  float32  (PyTorch layout)
    params: list of (w, b, gamma, beta, running_mean, running_var) per layer,
            w is (out, in) from the 1x1 Conv2d.
    tile_n2:   N2 tile size (multiple of 128, or None for generation-aware auto).
    mxu_dtype: dtype of the feature/MLP matmul operands.  jnp.bfloat16 runs at
               full MXU rate on v5e, v6e and v7x and halves the resident f1
               footprint; distances and k-NN selection always stay float32.
    Returns (B, C_out, N2) float32.
    """
    B, _, N1 = points1.shape
    N2 = points2.shape[2]
    C1 = features1.shape[1]
    C2 = features2.shape[1]
    eps = 1e-3  # BatchNorm2d eps in the reference module

    # Pad N2 to a multiple of 128 so tiles stay lane-dense (output is sliced).
    N2p = _p128(max(N2, 1))
    pad2 = N2p - N2

    budget = _vmem_budget_bytes()
    if tile_n2 is None:
        tile_n2 = _auto_tile_n2(N2p, N1, budget)
    assert N2p % tile_n2 == 0 and tile_n2 % 128 == 0, (tile_n2, N2p)
    num_tiles = N2p // tile_n2

    # Re-centre on the points1 centroid: distances are translation-invariant,
    # but the expanded |p1|^2 - 2 p1.p2 + |p2|^2 form is far better conditioned
    # for clouds whose coordinates are large in absolute value.
    p1 = points1.astype(jnp.float32)
    p2 = points2.astype(jnp.float32)
    centroid = jnp.mean(p1, axis=2, keepdims=True)                  # (B, 3, 1)
    p1 = p1 - centroid
    p2 = p2 - centroid

    # Augmented point matrices (padded from 5 to 8 channels) so the (N1, T)
    # squared-distance tile is one canonical MXU matmul inside the kernel:
    #   d2[n, t] = [x1, y1, z1, |p1|^2, 1, 0..][n] . [-2x2, -2y2, -2z2, 1, |p2|^2, 0..][t]
    sq1 = jnp.sum(p1 * p1, axis=1, keepdims=True)                   # (B, 1, N1)
    sq2 = jnp.sum(p2 * p2, axis=1, keepdims=True)                   # (B, 1, N2)
    zeros1 = jnp.zeros((B, 3, N1), jnp.float32)
    zeros2 = jnp.zeros((B, 3, N2), jnp.float32)
    a1 = jnp.transpose(
        jnp.concatenate([p1, sq1, jnp.ones_like(sq1), zeros1], axis=1),
        (0, 2, 1))                                                  # (B, N1, 8)
    a2 = jnp.concatenate([-2.0 * p2, jnp.ones_like(sq2), sq2, zeros2],
                         axis=1)                                    # (B, 8, N2)

    # Features stay channels-first: no boundary transposes at all.
    f1 = features1.astype(mxu_dtype)   # (B, C1, N1)
    f2 = features2.astype(mxu_dtype)   # (B, C2, N2)
    if pad2:
        a2 = jnp.pad(a2, ((0, 0), (0, 0), (0, pad2)))
        f2 = jnp.pad(f2, ((0, 0), (0, 0), (0, pad2)))

    # Fold eval-mode BN into the 1x1 convs (channels-first: no weight transpose).
    num_layers = len(params)
    flat_params = []
    for li, (w, b, gamma, beta, mean, var) in enumerate(params):
        scale = gamma / jnp.sqrt(var + eps)
        wf = (w * scale[:, None]).astype(mxu_dtype)                       # (out, in)
        bf = (((b - mean) * scale + beta)[:, None]).astype(jnp.float32)   # (out, 1)
        if li == 0:
            flat_params += [wf[:, :C1], wf[:, C1:], bf]
        else:
            flat_params += [wf, bf]
    c_out = params[-1][0].shape[0]

    # Single-buffer the resident inputs (their blocks change only with the
    # batch index) when the installed JAX supports pipeline_mode=Buffered(1).
    single_buffer = _buffered_single_supported()
    resident_kwargs = dict(pipeline_mode=pl.Buffered(1)) if single_buffer else {}

    in_specs = [
        pl.BlockSpec((None, N1, 8), lambda b, t: (b, 0, 0),
                     **resident_kwargs),                             # a1 (resident)
        pl.BlockSpec((None, 8, tile_n2), lambda b, t: (b, 0, t)),    # a2 tile
        pl.BlockSpec((None, C1, N1), lambda b, t: (b, 0, 0),
                     **resident_kwargs),                             # f1 (resident)
        pl.BlockSpec((None, C2, tile_n2), lambda b, t: (b, 0, t)),   # f2 tile
    ]
    for arr in flat_params:
        in_specs.append(pl.BlockSpec(arr.shape, lambda b, t: (0, 0),
                                     **resident_kwargs))
    out_specs = pl.BlockSpec((None, c_out, tile_n2), lambda b, t: (b, 0, t))

    # Scoped-VMEM limit sized to the (padded) working set, capped at ~75% of
    # this generation's VMEM so Mosaic keeps internal-scratch headroom.
    itm = jnp.dtype(mxu_dtype).itemsize
    rb = 1 if single_buffer else 2
    resident_bytes = (_p8(N1) * 128 * 4                       # a1 (lane-padded)
                      + _p8(C1) * _p128(N1) * itm             # f1
                      + sum(_p8(p.shape[0]) * _p128(p.shape[1])
                            * jnp.dtype(p.dtype).itemsize for p in flat_params))
    streamed_bytes = (8 * tile_n2 * 4                         # a2 tile
                      + _p8(C2) * tile_n2 * itm               # f2 tile
                      + _p8(c_out) * tile_n2 * 4)             # output tile
    knn_tmp = 6 * _p8(N1) * tile_n2 * 4                       # dd/wmat/sel live f32
    work = rb * resident_bytes + 2 * streamed_bytes + knn_tmp
    vmem_limit = int(min(budget, max(32 * 1024 * 1024, work + work // 2)))

    # Advisory cost estimate for XLA's scheduler.
    mlp_flops, cin = 0, C1 + C2
    for (w, *_rest) in params:
        mlp_flops += 2 * cin * w.shape[0] * N2p
        cin = w.shape[0]
    flops = B * (2 * 8 * N2p * N1 + 4 * k * N2p * N1 + 2 * C1 * N2p * N1
                 + mlp_flops)
    param_bytes = sum(int(p.size) * jnp.dtype(p.dtype).itemsize
                      for p in flat_params)
    bytes_accessed = (4 * (int(a1.size) + int(a2.size))
                      + itm * (int(f1.size) + int(f2.size))
                      + 4 * B * c_out * N2p + param_bytes)
    cost = pl.CostEstimate(flops=int(flops),
                           transcendentals=int(B * N2p * (2 * k + 1)),
                           bytes_accessed=int(bytes_accessed))

    out = pl.pallas_call(
        _make_kernel(k, num_layers),
        out_shape=jax.ShapeDtypeStruct((B, c_out, N2p), jnp.float32),
        grid=(B, num_tiles),
        in_specs=in_specs,
        out_specs=out_specs,
        compiler_params=pltpu.CompilerParams(
            dimension_semantics=("parallel", "parallel"),
            vmem_limit_bytes=vmem_limit),
        cost_estimate=cost,
    )(a1, a2, f1, f2, *flat_params)

    if pad2:
        out = out[:, :, :N2]
    return out


# ---------------------------------------------------------------------------
# Pure-JAX reference (mirrors the PyTorch forward, eval-mode BN)
# ---------------------------------------------------------------------------

def _reference(points1, points2, features1, features2, params, k):
    eps = 1e-3
    hp = jax.lax.Precision.HIGHEST
    p1t = jnp.transpose(points1, (0, 2, 1))
    p2t = jnp.transpose(points2, (0, 2, 1))
    f1t = jnp.transpose(features1, (0, 2, 1))
    f2t = jnp.transpose(features2, (0, 2, 1))

    d2 = (jnp.sum(p2t ** 2, -1)[:, :, None] + jnp.sum(p1t ** 2, -1)[:, None, :]
          - 2.0 * jnp.einsum("bnd,bmd->bnm", p2t, p1t, precision=hp))
    dist = jnp.sqrt(jnp.maximum(d2, 0.0))
    neg_vals, ind = jax.lax.top_k(-dist, k)
    topd = -neg_vals
    inv = 1.0 / (topd + 1e-10)
    wts = inv / jnp.sum(inv, -1, keepdims=True)
    gathered = jax.vmap(lambda f, i: f[i])(f1t, ind)           # (B, N2, k, C1)
    new_f = jnp.sum(gathered * wts[..., None], axis=2)          # (B, N2, C1)
    x = jnp.concatenate([new_f, f2t], axis=-1)

    for (w, b, gamma, beta, mean, var) in params:
        y = jnp.einsum("bnc,oc->bno", x, w, precision=hp) + b
        y = (y - mean) / jnp.sqrt(var + eps) * gamma + beta
        x = jnp.maximum(y, 0.0)
    return jnp.transpose(x, (0, 2, 1))


# ---------------------------------------------------------------------------
# Demo / self-test
# ---------------------------------------------------------------------------

if __name__ == "__main__":
    key = jax.random.PRNGKey(0)
    B, N1, N2 = 2, 256, 256
    C1, C2 = 8, 8
    K = 3
    out_channels = [16, 32]
    in_ch = C1 + C2

    keys = jax.random.split(key, 4 + 6 * len(out_channels))
    points1 = jax.random.normal(keys[0], (B, 3, N1), jnp.float32)
    points2 = jax.random.normal(keys[1], (B, 3, N2), jnp.float32)
    features1 = jax.random.normal(keys[2], (B, C1, N1), jnp.float32)
    features2 = jax.random.normal(keys[3], (B, C2, N2), jnp.float32)

    params = []
    ic = in_ch
    ki = 4
    for oc in out_channels:
        w = 0.1 * jax.random.normal(keys[ki], (oc, ic), jnp.float32); ki += 1
        b = 0.1 * jax.random.normal(keys[ki], (oc,), jnp.float32); ki += 1
        gamma = 1.0 + 0.1 * jax.random.normal(keys[ki], (oc,), jnp.float32); ki += 1
        beta = 0.1 * jax.random.normal(keys[ki], (oc,), jnp.float32); ki += 1
        mean = 0.05 * jax.random.normal(keys[ki], (oc,), jnp.float32); ki += 1
        var = jnp.abs(1.0 + 0.1 * jax.random.normal(keys[ki], (oc,), jnp.float32)); ki += 1
        params.append((w, b, gamma, beta, mean, var))
        ic = oc

    ref = _reference(points1, points2, features1, features2, params, K)

    # Query columns whose k-NN boundary (k-th vs (k+1)-th distance) is a
    # near-tie may legitimately resolve to a different-but-equivalent
    # neighbour set under f32 rounding; exclude them from the elementwise
    # check (with random data this excludes essentially nothing).
    p1t = jnp.transpose(points1, (0, 2, 1))
    p2t = jnp.transpose(points2, (0, 2, 1))
    d2 = (jnp.sum(p2t ** 2, -1)[:, :, None] + jnp.sum(p1t ** 2, -1)[:, None, :]
          - 2.0 * jnp.einsum("bnd,bmd->bnm", p2t, p1t,
                             precision=jax.lax.Precision.HIGHEST))
    dist = jnp.sqrt(jnp.maximum(d2, 0.0))
    nd, _ = jax.lax.top_k(-dist, K + 1)
    gap = (-nd[..., K]) - (-nd[..., K - 1])
    safe = (gap > 1e-4)[:, None, :]                     # (B, 1, N2)
    assert float(jnp.mean(safe.astype(jnp.float32))) > 0.95

    # 1) f32 MXU path, generation-aware auto tile (256 here -> grid (B, 1)).
    #    Tolerance is slightly looser than an exact-divide version because the
    #    kernel uses EUP approximate reciprocals per the perf guidance.
    out = flow_embedding(points1, points2, features1, features2, params, K)
    out = jax.block_until_ready(out)
    assert out.shape == (B, out_channels[-1], N2), out.shape
    err = float(jnp.max(jnp.abs(out - ref) * safe))
    assert err < 5e-3, err

    # 2) bf16 MXU fast path with explicit 128-wide tiles (exercises multi-tile).
    out_bf16 = flow_embedding(points1, points2, features1, features2, params, K,
                              tile_n2=128, mxu_dtype=jnp.bfloat16)
    out_bf16 = jax.block_until_ready(out_bf16)
    rel = float(jnp.linalg.norm((out_bf16 - ref) * safe)
                / jnp.linalg.norm(ref * safe))
    assert rel < 5e-2, rel

    # 3) N2 not a multiple of 128 -> wrapper pads to 256 and slices the output.
    N2b = 192
    p2b, f2b = points2[:, :, :N2b], features2[:, :, :N2b]
    refb = _reference(points1, p2b, features1, f2b, params, K)
    outb = flow_embedding(points1, p2b, features1, f2b, params, K)
    outb = jax.block_until_ready(outb)
    assert outb.shape == (B, out_channels[-1], N2b), outb.shape
    errb = float(jnp.max(jnp.abs(outb - refb) * safe[:, :, :N2b]))
    assert errb < 5e-3, errb

    print("KERNEL_OK")
</pallas_src>

<mosaic_0001>
module attributes {stable_mosaic.version = 11 : i64} {
  func.func @_copy_kernel(%arg0: i32, %arg1: memref<8x128xf32, #tpu.memory_space<vmem>>, %arg2: memref<8x128xf32, #tpu.memory_space<vmem>>) attributes {dimension_semantics = [#tpu.dimension_semantics<arbitrary>], iteration_bounds = array<i64: 2>, scalar_prefetch = 0 : i64, scratch_operands = 0 : i64, tpu.core_type = #tpu.core_type<tc>, window_params = [{pipeline_mode = #tpu.pipeline_mode<synchronous>, transform_indices = @transform_0, window_bounds = array<i64: 8, 128>}, {transform_indices = @transform_1, window_bounds = array<i64: 8, 128>}]} {
    %c0 = arith.constant 0 : index
    %c0_0 = arith.constant 0 : index
    %0 = vector.load %arg1[%c0, %c0_0] : memref<8x128xf32, #tpu.memory_space<vmem>>, vector<8x128xf32>
    %c0_1 = arith.constant 0 : index
    %c0_2 = arith.constant 0 : index
    %1 = vector.load %arg2[%c0_1, %c0_2] : memref<8x128xf32, #tpu.memory_space<vmem>>, vector<8x128xf32>
    tpu.vector_store %arg2[%c0_1, %c0_2], %0 {strides = array<i32>} : memref<8x128xf32, #tpu.memory_space<vmem>>, vector<8x128xf32>,
    return
  }
  func.func @transform_0(%arg0: i32) -> (i32, i32) {
    %c0_i32 = arith.constant 0 : i32
    %c0_i32_0 = arith.constant 0 : i32
    return %arg0, %c0_i32 : i32, i32
  }
  func.func @transform_1(%arg0: i32) -> (i32, i32) {
    %c0_i32 = arith.constant 0 : i32
    %c0_i32_0 = arith.constant 0 : i32
    return %arg0, %c0_i32 : i32, i32
  }
}

module attributes {stable_mosaic.version = 11 : i64} {
  func.func @kernel(%arg0: i32, %arg1: i32, %arg2: memref<1x256x8xf32, #tpu.memory_space<vmem>>, %arg3: memref<1x8x256xf32, #tpu.memory_space<vmem>>, %arg4: memref<1x8x256xf32, #tpu.memory_space<vmem>>, %arg5: memref<1x8x256xf32, #tpu.memory_space<vmem>>, %arg6: memref<16x8xf32, #tpu.memory_space<vmem>>, %arg7: memref<16x8xf32, #tpu.memory_space<vmem>>, %arg8: memref<16x1xf32, #tpu.memory_space<vmem>>, %arg9: memref<32x16xf32, #tpu.memory_space<vmem>>, %arg10: memref<32x1xf32, #tpu.memory_space<vmem>>, %arg11: memref<1x32x256xf32, #tpu.memory_space<vmem>>) attributes {dimension_semantics = [#tpu.dimension_semantics<parallel>, #tpu.dimension_semantics<parallel>], iteration_bounds = array<i64: 2, 1>, scalar_prefetch = 0 : i64, scratch_operands = 0 : i64, tpu.core_type = #tpu.core_type<tc>, window_params = [{transform_indices = @transform_0, window_bounds = array<i64: 1, 256, 8>}, {transform_indices = @transform_1, window_bounds = array<i64: 1, 8, 256>}, {transform_indices = @transform_2, window_bounds = array<i64: 1, 8, 256>}, {transform_indices = @transform_3, window_bounds = array<i64: 1, 8, 256>}, {pipeline_mode = #tpu.pipeline_mode<synchronous>, transform_indices = @transform_4, window_bounds = array<i64: 16, 8>}, {pipeline_mode = #tpu.pipeline_mode<synchronous>, transform_indices = @transform_5, window_bounds = array<i64: 16, 8>}, {pipeline_mode = #tpu.pipeline_mode<synchronous>, transform_indices = @transform_6, window_bounds = array<i64: 16, 1>}, {pipeline_mode = #tpu.pipeline_mode<synchronous>, transform_indices = @transform_7, window_bounds = array<i64: 32, 16>}, {pipeline_mode = #tpu.pipeline_mode<synchronous>, transform_indices = @transform_8, window_bounds = array<i64: 32, 1>}, {transform_indices = @transform_9, window_bounds = array<i64: 1, 32, 256>}]} {
    %c0 = arith.constant 0 : index
    %c0_0 = arith.constant 0 : index
    %c0_1 = arith.constant 0 : index
    %0 = vector.load %arg2[%c0, %c0_0, %c0_1] : memref<1x256x8xf32, #tpu.memory_space<vmem>>, vector<1x256x8xf32>
    %1 = vector.shape_cast %0 : vector<1x256x8xf32> to vector<256x8xf32>
    %c0_2 = arith.constant 0 : index
    %c0_3 = arith.constant 0 : index
    %c0_4 = arith.constant 0 : index
    %2 = vector.load %arg3[%c0_2, %c0_3, %c0_4] : memref<1x8x256xf32, #tpu.memory_space<vmem>>, vector<1x8x256xf32>
    %3 = vector.shape_cast %2 : vector<1x8x256xf32> to vector<8x256xf32>
    %c0_5 = arith.constant 0 : index
    %c0_6 = arith.constant 0 : index
    %c0_7 = arith.constant 0 : index
    %4 = vector.load %arg4[%c0_5, %c0_6, %c0_7] : memref<1x8x256xf32, #tpu.memory_space<vmem>>, vector<1x8x256xf32>
    %5 = vector.shape_cast %4 : vector<1x8x256xf32> to vector<8x256xf32>
    %c0_8 = arith.constant 0 : index
    %c0_9 = arith.constant 0 : index
    %c0_10 = arith.constant 0 : index
    %6 = vector.load %arg5[%c0_8, %c0_9, %c0_10] : memref<1x8x256xf32, #tpu.memory_space<vmem>>, vector<1x8x256xf32>
    %7 = vector.shape_cast %6 : vector<1x8x256xf32> to vector<8x256xf32>
    %cst = arith.constant dense<0.000000e+00> : vector<256x256xf32>
    %8 = tpu.matmul %1, %3, %cst {dimension_numbers = #tpu.dot_dimension_numbers<[1], [0], [0], [1], [0, 0, 1, 1], [], []>} : vector<256x8xf32>, vector<8x256xf32>, vector<256x256xf32> -> vector<256x256xf32>
    %cst_11 = arith.constant 0.000000e+00 : f32
    %9 = vector.broadcast %cst_11 : f32 to vector<256x256xf32>
    %cst_12 = arith.constant dense<0x7F800000> : vector<256xf32>
    %10 = vector.multi_reduction <minimumf>, %8, %cst_12 [0] : vector<256x256xf32> to vector<256xf32>
    %11 = vector.shape_cast %10 : vector<256xf32> to vector<1x256xf32>
    %cst_13 = arith.constant 0.000000e+00 : f32
    %12 = vector.broadcast %cst_13 : f32 to vector<1x256xf32>
    %13 = arith.maximumf %11, %12 : vector<1x256xf32>
    %14 = math.sqrt %13 : vector<1x256xf32>
    %cst_14 = arith.constant 1.000000e-10 : f32
    %15 = vector.broadcast %cst_14 : f32 to vector<1x256xf32>
    %16 = arith.addf %14, %15 : vector<1x256xf32>
    %17 = tpu.reciprocal %16 {approx = true} : vector<1x256xf32> -> vector<1x256xf32>
    %18 = vector.broadcast %11 : vector<1x256xf32> to vector<256x256xf32>
    %19 = arith.cmpf ole, %8, %18 : vector<256x256xf32>
    %20 = vector.shape_cast %17 : vector<1x256xf32> to vector<1x256xf32>
    %21 = vector.broadcast %20 : vector<1x256xf32> to vector<256x256xf32>
    %22 = arith.select %19, %21, %9 : vector<256x256xi1>, vector<256x256xf32>
    %cst_15 = arith.constant 3.000000e+38 : f32
    %23 = vector.broadcast %cst_15 : f32 to vector<256x256xf32>
    %24 = arith.select %19, %23, %8 : vector<256x256xi1>, vector<256x256xf32>
    %cst_16 = arith.constant dense<0x7F800000> : vector<256xf32>
    %25 = vector.multi_reduction <minimumf>, %24, %cst_16 [0] : vector<256x256xf32> to vector<256xf32>
    %26 = vector.shape_cast %25 : vector<256xf32> to vector<1x256xf32>
    %cst_17 = arith.constant 0.000000e+00 : f32
    %27 = vector.broadcast %cst_17 : f32 to vector<1x256xf32>
    %28 = arith.maximumf %26, %27 : vector<1x256xf32>
    %29 = math.sqrt %28 : vector<1x256xf32>
    %cst_18 = arith.constant 1.000000e-10 : f32
    %30 = vector.broadcast %cst_18 : f32 to vector<1x256xf32>
    %31 = arith.addf %29, %30 : vector<1x256xf32>
    %32 = tpu.reciprocal %31 {approx = true} : vector<1x256xf32> -> vector<1x256xf32>
    %33 = vector.broadcast %26 : vector<1x256xf32> to vector<256x256xf32>
    %34 = arith.cmpf ole, %24, %33 : vector<256x256xf32>
    %35 = vector.shape_cast %32 : vector<1x256xf32> to vector<1x256xf32>
    %36 = vector.broadcast %35 : vector<1x256xf32> to vector<256x256xf32>
    %37 = arith.select %34, %36, %22 : vector<256x256xi1>, vector<256x256xf32>
    %cst_19 = arith.constant 3.000000e+38 : f32
    %38 = vector.broadcast %cst_19 : f32 to vector<256x256xf32>
    %39 = arith.select %34, %38, %24 : vector<256x256xi1>, vector<256x256xf32>
    %cst_20 = arith.constant dense<0x7F800000> : vector<256xf32>
    %40 = vector.multi_reduction <minimumf>, %39, %cst_20 [0] : vector<256x256xf32> to vector<256xf32>
    %41 = vector.shape_cast %40 : vector<256xf32> to vector<1x256xf32>
    %cst_21 = arith.constant 0.000000e+00 : f32
    %42 = vector.broadcast %cst_21 : f32 to vector<1x256xf32>
    %43 = arith.maximumf %41, %42 : vector<1x256xf32>
    %44 = math.sqrt %43 : vector<1x256xf32>
    %cst_22 = arith.constant 1.000000e-10 : f32
    %45 = vector.broadcast %cst_22 : f32 to vector<1x256xf32>
    %46 = arith.addf %44, %45 : vector<1x256xf32>
    %47 = tpu.reciprocal %46 {approx = true} : vector<1x256xf32> -> vector<1x256xf32>
    %48 = vector.broadcast %41 : vector<1x256xf32> to vector<256x256xf32>
    %49 = arith.cmpf ole, %39, %48 : vector<256x256xf32>
    %50 = vector.shape_cast %47 : vector<1x256xf32> to vector<1x256xf32>
    %51 = vector.broadcast %50 : vector<1x256xf32> to vector<256x256xf32>
    %52 = arith.select %49, %51, %37 : vector<256x256xi1>, vector<256x256xf32>
    %cst_23 = arith.constant dense<0.000000e+00> : vector<8x256xf32>
    %53 = tpu.matmul %5, %52, %cst_23 {dimension_numbers = #tpu.dot_dimension_numbers<[1], [0], [0], [1], [0, 0, 1, 1], [], []>} : vector<8x256xf32>, vector<256x256xf32>, vector<8x256xf32> -> vector<8x256xf32>
    %cst_24 = arith.constant dense<0.000000e+00> : vector<256xf32>
    %54 = vector.multi_reduction <add>, %52, %cst_24 [0] : vector<256x256xf32> to vector<256xf32>
    %55 = vector.shape_cast %54 : vector<256xf32> to vector<1x256xf32>
    %56 = tpu.reciprocal %55 {approx = true} : vector<1x256xf32> -> vector<1x256xf32>
    %57 = vector.broadcast %56 : vector<1x256xf32> to vector<8x256xf32>
    %58 = arith.mulf %53, %57 : vector<8x256xf32>
    %c0_25 = arith.constant 0 : index
    %c0_26 = arith.constant 0 : index
    %59 = vector.load %arg6[%c0_25, %c0_26] : memref<16x8xf32, #tpu.memory_space<vmem>>, vector<16x8xf32>
    %cst_27 = arith.constant dense<0.000000e+00> : vector<16x256xf32>
    %60 = tpu.matmul %59, %58, %cst_27 {dimension_numbers = #tpu.dot_dimension_numbers<[1], [0], [0], [1], [0, 0, 1, 1], [], []>} : vector<16x8xf32>, vector<8x256xf32>, vector<16x256xf32> -> vector<16x256xf32>
    %c0_28 = arith.constant 0 : index
    %c0_29 = arith.constant 0 : index
    %61 = vector.load %arg7[%c0_28, %c0_29] : memref<16x8xf32, #tpu.memory_space<vmem>>, vector<16x8xf32>
    %cst_30 = arith.constant dense<0.000000e+00> : vector<16x256xf32>
    %62 = tpu.matmul %61, %7, %cst_30 {dimension_numbers = #tpu.dot_dimension_numbers<[1], [0], [0], [1], [0, 0, 1, 1], [], []>} : vector<16x8xf32>, vector<8x256xf32>, vector<16x256xf32> -> vector<16x256xf32>
    %63 = arith.addf %60, %62 : vector<16x256xf32>
    %c0_31 = arith.constant 0 : index
    %c0_32 = arith.constant 0 : index
    %64 = vector.load %arg8[%c0_31, %c0_32] : memref<16x1xf32, #tpu.memory_space<vmem>>, vector<16x1xf32>
    %65 = vector.broadcast %64 : vector<16x1xf32> to vector<16x256xf32>
    %66 = arith.addf %63, %65 : vector<16x256xf32>
    %cst_33 = arith.constant 0.000000e+00 : f32
    %67 = vector.broadcast %cst_33 : f32 to vector<16x256xf32>
    %68 = arith.maximumf %66, %67 : vector<16x256xf32>
    %c0_34 = arith.constant 0 : index
    %c0_35 = arith.constant 0 : index
    %69 = vector.load %arg9[%c0_34, %c0_35] : memref<32x16xf32, #tpu.memory_space<vmem>>, vector<32x16xf32>
    %cst_36 = arith.constant dense<0.000000e+00> : vector<32x256xf32>
    %70 = tpu.matmul %69, %68, %cst_36 {dimension_numbers = #tpu.dot_dimension_numbers<[1], [0], [0], [1], [0, 0, 1, 1], [], []>} : vector<32x16xf32>, vector<16x256xf32>, vector<32x256xf32> -> vector<32x256xf32>
    %c0_37 = arith.constant 0 : index
    %c0_38 = arith.constant 0 : index
    %71 = vector.load %arg10[%c0_37, %c0_38] : memref<32x1xf32, #tpu.memory_space<vmem>>, vector<32x1xf32>
    %72 = vector.broadcast %71 : vector<32x1xf32> to vector<32x256xf32>
    %73 = arith.addf %70, %72 : vector<32x256xf32>
    %cst_39 = arith.constant 0.000000e+00 : f32
    %74 = vector.broadcast %cst_39 : f32 to vector<32x256xf32>
    %75 = arith.maximumf %73, %74 : vector<32x256xf32>
    %c0_40 = arith.constant 0 : index
    %c0_41 = arith.constant 0 : index
    %c0_42 = arith.constant 0 : index
    %76 = vector.load %arg11[%c0_40, %c0_41, %c0_42] : memref<1x32x256xf32, #tpu.memory_space<vmem>>, vector<1x32x256xf32>
    %77 = vector.shape_cast %76 : vector<1x32x256xf32> to vector<32x256xf32>
    %78 = vector.shape_cast %75 : vector<32x256xf32> to vector<1x32x256xf32>
    tpu.vector_store %arg11[%c0_40, %c0_41, %c0_42], %78 {strides = array<i32>} : memref<1x32x256xf32, #tpu.memory_space<vmem>>, vector<1x32x256xf32>,
    return
  }
  func.func @transform_0(%arg0: i32, %arg1: i32) -> (i32, i32, i32) {
    %c0_i32 = arith.constant 0 : i32
    %c0_i32_0 = arith.constant 0 : i32
    %c0_i32_1 = arith.constant 0 : i32
    return %arg0, %c0_i32, %c0_i32_0 : i32, i32, i32
  }
  func.func @transform_1(%arg0: i32, %arg1: i32) -> (i32, i32, i32) {
    %c0_i32 = arith.constant 0 : i32
    %c0_i32_0 = arith.constant 0 : i32
    return %arg0, %c0_i32, %arg1 : i32, i32, i32
  }
  func.func @transform_2(%arg0: i32, %arg1: i32) -> (i32, i32, i32) {
    %c0_i32 = arith.constant 0 : i32
    %c0_i32_0 = arith.constant 0 : i32
    %c0_i32_1 = arith.constant 0 : i32
    return %arg0, %c0_i32, %c0_i32_0 : i32, i32, i32
  }
  func.func @transform_3(%arg0: i32, %arg1: i32) -> (i32, i32, i32) {
    %c0_i32 = arith.constant 0 : i32
    %c0_i32_0 = arith.constant 0 : i32
    return %arg0, %c0_i32, %arg1 : i32, i32, i32
  }
  func.func @transform_4(%arg0: i32, %arg1: i32) -> (i32, i32) {
    %c0_i32 = arith.constant 0 : i32
    %c0_i32_0 = arith.constant 0 : i32
    %c0_i32_1 = arith.constant 0 : i32
    return %c0_i32, %c0_i32_0 : i32, i32
  }
  func.func @transform_5(%arg0: i32, %arg1: i32) -> (i32, i32) {
    %c0_i32 = arith.constant 0 : i32
    %c0_i32_0 = arith.constant 0 : i32
    %c0_i32_1 = arith.constant 0 : i32
    return %c0_i32, %c0_i32_0 : i32, i32
  }
  func.func @transform_6(%arg0: i32, %arg1: i32) -> (i32, i32) {
    %c0_i32 = arith.constant 0 : i32
    %c0_i32_0 = arith.constant 0 : i32
    %c0_i32_1 = arith.constant 0 : i32
    return %c0_i32, %c0_i32_0 : i32, i32
  }
  func.func @transform_7(%arg0: i32, %arg1: i32) -> (i32, i32) {
    %c0_i32 = arith.constant 0 : i32
    %c0_i32_0 = arith.constant 0 : i32
    %c0_i32_1 = arith.constant 0 : i32
    return %c0_i32, %c0_i32_0 : i32, i32
  }
  func.func @transform_8(%arg0: i32, %arg1: i32) -> (i32, i32) {
    %c0_i32 = arith.constant 0 : i32
    %c0_i32_0 = arith.constant 0 : i32
    %c0_i32_1 = arith.constant 0 : i32
    return %c0_i32, %c0_i32_0 : i32, i32
  }
  func.func @transform_9(%arg0: i32, %arg1: i32) -> (i32, i32, i32) {
    %c0_i32 = arith.constant 0 : i32
    %c0_i32_0 = arith.constant 0 : i32
    return %arg0, %c0_i32, %arg1 : i32, i32, i32
  }
}

</mosaic_0001>

<llo_original>
// kernel: tpu_custom_call.1
$region0: #{tpu_custom_call.1}
  #allocation0 [shape = 'u32[]', space=smem, size = 0x4, offset = 0x4, fixed_abs, tag = 'smem constant byte address 0x4 - core index']
  #allocation1 [shape = 'u32[144,128]{1,0:T(1,128)}', space=vmem, size = 0x12000, scoped, tag = 'internal scratch']
  %s0 = inlined_call_operand.hbm [shape: f32[16,128], index: 0, kind: input, shape index: {}]
  %s1 = inlined_call_operand.hbm [shape: f32[16,128], index: 1, kind: output, shape index: {}]
  %s2 = sld [smem:[#allocation0]]
  $region41: #{tpu_custom_call.1} parent=0
    _
  %s4 = ssub.s32 1, %s2
  %s5 = scalar_select 0, %s4, %s2
  $region1: #{tpu_custom_call.1} parent=0
    #allocation2 [shape = 'u8[4096]{0}', space=vmem, size = 0x1000, scoped, tag = 'input window, operand 0, single buffered']
    #allocation3 [shape = 's32[2]{0}', space=sflag, size = 0x8, scoped, tag = 'scoped memory for tpu_custom_call.1']
    #allocation4 [shape = 's32[2]{0}', space=sflag, size = 0x8, scoped, tag = 'scoped memory for tpu_custom_call.1']
    #allocation5 [shape = 'u8[8192]{0}', space=vmem, size = 0x2000, scoped, tag = 'output window, operand 0']
    %6 = vsyncpa [#allocation3], 0
    %7 = vsyncpa [#allocation4], 0
    %s8 = scalar_lea.sflag [#allocation4], 1
    %9 = vsyncpa %s8, 0
    loop: start=0, step=1, limit=4
    $region2: #{tpu_custom_call.1} parent=1 // loop_pre_header
      _
    $region3: #{tpu_custom_call.1} parent=1 // loop_header
      %s11 = sphi 0, %s15
      %p12 = scmp.ge.s32.totalorder %s11, 4
      %s21 = sphi 0, %s23
      %s24 = sphi 0, %s21
      %s25 = sphi 0, %s24
      %s41 = sphi 0, %s25
      %s47 = sphi 0, %s49
      %s50 = sphi 0, %s47
      %s51 = sphi 0, %s50
      %s67 = sphi 0, %s51
    $region4: #{tpu_custom_call.1} parent=1 // loop_header_branch
      %14 = sbr.rel (%p12) target = $region8
    $region5: #{tpu_custom_call.1} parent=1 // loop_body
      %s16 = ssub.s32 %s11, 1
      %s17 = ssub.s32 %s11, 2
      %s18 = sadd.s32 %s11, 1
      %s19 = ssub.s32 %s11, %s18
      %p20 = scmp.eq.s32.totalorder %s19, 0
      %s22 = sadd.s32 %s21, 1
      %s23 = scalar_select %p20, %s21, %s22
      %p26 = pneg %p20
      %p27 = scmp.eq.s32.totalorder %s11, 1
      %p28 = por %p26, %p27
      %p29 = scmp.ne.s32.totalorder %s21, %s24
      %p30 = scmp.eq.s32.totalorder %s11, 0
      %p31 = por %p29, %p30
      %p32 = scmp.ne.s32.totalorder %s21, %s24
      %p33 = scmp.eq.s32.totalorder %s16, 1
      %p34 = por %p32, %p33
      %p35 = scmp.ne.s32.totalorder %s24, %s25
      %p36 = scmp.eq.s32.totalorder %s16, 0
      %p37 = por %p35, %p36
      %p38 = scmp.ne.s32.totalorder %s24, %s25
      %p39 = scmp.eq.s32.totalorder %s17, 1
      %p40 = por %p38, %p39
      %p42 = scmp.ne.s32.totalorder %s25, %s41
      %p43 = scmp.eq.s32.totalorder %s17, 0
      %p44 = por %p42, %p43
      %s45 = ssub.s32 %s11, %s18
      %p46 = scmp.eq.s32.totalorder %s45, 0
      %s48 = sadd.s32 %s47, 1
      %s49 = scalar_select %p46, %s47, %s48
      %p52 = pneg %p46
      %p53 = scmp.eq.s32.totalorder %s11, 1
      %p54 = por %p52, %p53
      %p55 = scmp.ne.s32.totalorder %s47, %s50
      %p56 = scmp.eq.s32.totalorder %s11, 0
      %p57 = por %p55, %p56
      %p58 = scmp.ne.s32.totalorder %s47, %s50
      %p59 = scmp.eq.s32.totalorder %s16, 1
      %p60 = por %p58, %p59
      %p61 = scmp.ne.s32.totalorder %s50, %s51
      %p62 = scmp.eq.s32.totalorder %s16, 0
      %p63 = por %p61, %p62
      %p64 = scmp.ne.s32.totalorder %s50, %s51
      %p65 = scmp.eq.s32.totalorder %s17, 1
      %p66 = por %p64, %p65
      %p68 = scmp.ne.s32.totalorder %s51, %s67
      %p69 = scmp.eq.s32.totalorder %s17, 0
      %p70 = por %p68, %p69
      %p71 = scmp.le.s32.totalorder 1, %s11
      %p72 = scmp.lt.s32.totalorder %s11, 3
      %p73 = pnand %p71, %p72
      %p74 = pneg %p73
      // Predicated region
      $region9: #{tpu_custom_call.1} parent=5 // pred_check
        _
      $region10: #{tpu_custom_call.1} parent=5 // pred_check_branch
        %76 = sbr.rel (%p73) target = $region12
      $region11: #{tpu_custom_call.1} parent=5 // pred_region
        %s77 = ssub.s32 %s11, 1
        // Predicated region
        $region13: #{tpu_custom_call.1} parent=11 // pred_check
          %p78 = pneg %p37
        $region14: #{tpu_custom_call.1} parent=11 // pred_check_branch
          %80 = sbr.rel (%p78) target = $region16
        $region15: #{tpu_custom_call.1} parent=11 // pred_region
          %s82 = ssub.s32 128, 128
          %83 = vsyncadd [#allocation3], %s82
          %s84 = smul.addr %s16, 128
          %s85 = scalar_lea.hbm %s0, %s84
          %s87 = sshll.u32 [#allocation2], 4
          %s88 = int_to_ptr.vmem [resolvable:$true] %s87
          %90 = dma.hbm_to_vmem [thread:$0]  %s85, 128, %s88, [#allocation3]
        $region16: #{tpu_custom_call.1} parent=11 // pred_fallthru
          _
      $region12: #{tpu_custom_call.1} parent=5 // pred_fallthru
        _
      %p91 = scmp.lt.s32.totalorder %s11, 2
      // Predicated region
      $region17: #{tpu_custom_call.1} parent=5 // pred_check
        %p92 = pneg %p91
      $region18: #{tpu_custom_call.1} parent=5 // pred_check_branch
        %94 = sbr.rel (%p92) target = $region20
      $region19: #{tpu_custom_call.1} parent=5 // pred_region
        _
      $region20: #{tpu_custom_call.1} parent=5 // pred_fallthru
        _
      %p95 = scmp.le.s32.totalorder 1, %s11
      %p96 = scmp.lt.s32.totalorder %s11, 3
      %p97 = pnand %p95, %p96
      %p98 = pneg %p97
      // Predicated region
      $region21: #{tpu_custom_call.1} parent=5 // pred_check
        _
      $region22: #{tpu_custom_call.1} parent=5 // pred_check_branch
        %100 = sbr.rel (%p97) target = $region24
      $region23: #{tpu_custom_call.1} parent=5 // pred_region
        %s101 = ssub.s32 %s11, 1
        // Predicated region
        $region25: #{tpu_custom_call.1} parent=23 // pred_check
          %p102 = pneg %p37
        $region26: #{tpu_custom_call.1} parent=23 // pred_check_branch
          %104 = sbr.rel (%p102) target = $region28
        $region27: #{tpu_custom_call.1} parent=23 // pred_region
          %105 = dma.done [#allocation3], 128
        $region28: #{tpu_custom_call.1} parent=23 // pred_fallthru
          _
        %p106 = pneg %p37
        %p107 = pneg %p34
        %p108 = pneg %p63
        %p109 = pneg %p60
        %s110 = sand.u32 %s50, 1
        %s111 = scalar_lea.sflag [#allocation4], %s110
        %s112 = sand.u32 %s50, 1
        %s113 = smul.addr %s112, 8
        %s114 = scalar_lea.vmem [#allocation5], %s113
        %v115 = vld [vmem:[#allocation2] sm:$0xff]
        %116 = vst [vmem:[%s114] sm:$0xff] %v115
        %s117 = sand.u32 %s50, 1
        %s118 = scalar_lea.sflag [#allocation4], %s117
        %s119 = sand.u32 %s50, 1
        %s120 = smul.addr %s119, 8
        %s121 = scalar_lea.vmem [#allocation5], %s120
        // Predicated region
        $region29: #{tpu_custom_call.1} parent=23 // pred_check
          %p122 = pneg %p60
        $region30: #{tpu_custom_call.1} parent=23 // pred_check_branch
          %124 = sbr.rel (%p122) target = $region32
        $region31: #{tpu_custom_call.1} parent=23 // pred_region
          %s126 = ssub.s32 128, 128
          %127 = vsyncadd %s118, %s126
          %s128 = smul.addr %s16, 128
          %s129 = scalar_lea.hbm %s1, %s128
          %s131 = sshll.u32 %s121, 4
          %s132 = int_to_ptr.vmem [resolvable:$true] %s131
          %134 = dma.vmem_to_hbm [thread:$0]  %s132, 128, %s129, %s118
        $region32: #{tpu_custom_call.1} parent=23 // pred_fallthru
          _
      $region24: #{tpu_custom_call.1} parent=5 // pred_fallthru
        _
      %p135 = scmp.le.s32.totalorder 2, %s11
      // Predicated region
      $region33: #{tpu_custom_call.1} parent=5 // pred_check
        %p136 = pneg %p135
      $region34: #{tpu_custom_call.1} parent=5 // pred_check_branch
        %138 = sbr.rel (%p136) target = $region36
      $region35: #{tpu_custom_call.1} parent=5 // pred_region
        %s139 = ssub.s32 %s11, 2
        // Predicated region
        $region37: #{tpu_custom_call.1} parent=35 // pred_check
          %p140 = pneg %p66
        $region38: #{tpu_custom_call.1} parent=35 // pred_check_branch
          %142 = sbr.rel (%p140) target = $region40
        $region39: #{tpu_custom_call.1} parent=35 // pred_region
          %s143 = sand.u32 %s51, 1
          %s144 = scalar_lea.sflag [#allocation4], %s143
          %s145 = sand.u32 %s51, 1
          %s146 = smul.addr %s145, 8
          %s147 = scalar_lea.vmem [#allocation5], %s146
          %148 = dma.done %s144, 128
        $region40: #{tpu_custom_call.1} parent=35 // pred_fallthru
          _
      $region36: #{tpu_custom_call.1} parent=5 // pred_fallthru
        _
    $region6: #{tpu_custom_call.1} parent=1 // loop_footer
      %s15 = sadd.s32 1, %s11
    $region7: #{tpu_custom_call.1} parent=1 // loop_footer_branch
      %10 = sbr.rel target = $region3
    $region8: #{tpu_custom_call.1} parent=1 // loop_exit
      _
    %149 = vsyncpa [#allocation3], 1
    %s150 = scalar_lea.sflag [#allocation3], 1
    %151 = vsyncpa %s150, 1
    %152 = vsyncpa [#allocation4], 1
    %s153 = scalar_lea.sflag [#allocation4], 1
    %154 = vsyncpa %s153, 1

// kernel: tpu_custom_call.1
$region0: #{tpu_custom_call.1}
  #allocation0 [shape = 'u32[]', space=smem, size = 0x4, offset = 0x4, fixed_abs, tag = 'smem constant byte address 0x4 - core index']
  #allocation1 [shape = 'u32[144,128]{1,0:T(1,128)}', space=vmem, size = 0x12000, scoped, tag = 'internal scratch']
  %s0 = inlined_call_operand.vmem [shape: f32[2,256,8], index: 0, kind: input, shape index: {}]
  %s1 = inlined_call_operand.vmem [shape: f32[2,8,256], index: 1, kind: input, shape index: {}]
  %s2 = inlined_call_operand.vmem [shape: f32[2,8,256], index: 2, kind: input, shape index: {}]
  %s3 = inlined_call_operand.vmem [shape: f32[2,8,256], index: 3, kind: input, shape index: {}]
  %s4 = inlined_call_operand.vmem [shape: f32[16,8], index: 4, kind: input, shape index: {}]
  %s5 = inlined_call_operand.vmem [shape: f32[16,8], index: 5, kind: input, shape index: {}]
  %s6 = inlined_call_operand.vmem [shape: f32[16,1], index: 6, kind: input, shape index: {}]
  %s7 = inlined_call_operand.vmem [shape: f32[32,16], index: 7, kind: input, shape index: {}]
  %s8 = inlined_call_operand.vmem [shape: f32[32,1], index: 8, kind: input, shape index: {}]
  %s9 = inlined_call_operand.hbm [shape: f32[2,32,256], index: 9, kind: output, shape index: {}]
  %s10 = sld [smem:[#allocation0]]
  $region69: #{tpu_custom_call.1} parent=0
    _
  %s12 = ssub.s32 1, %s10
  %s13 = scalar_select 0, %s12, %s10
  $region1: #{tpu_custom_call.1} parent=0
    #allocation2 [shape = 'u8[65536]{0}', space=vmem, size = 0x10000, scoped, tag = 'output window, operand 0']
    #allocation3 [shape = 's32[2]{0}', space=sflag, size = 0x8, scoped, tag = 'scoped memory for tpu_custom_call.1']
    %14 = vsyncpa [#allocation3], 0
    %s15 = scalar_lea.sflag [#allocation3], 1
    %16 = vsyncpa %s15, 0
    loop: start=0, step=1, limit=4
    $region2: #{tpu_custom_call.1} parent=1 // loop_pre_header
      _
    $region3: #{tpu_custom_call.1} parent=1 // loop_header
      %s18 = sphi 0, %s22
      %p19 = scmp.ge.s32.totalorder %s18, 4
      %s25 = sphi 0, %s37
      %s26 = sphi 0, %s33
      %s27 = sphi 0, %s25
      %s28 = sphi 0, %s26
      %s29 = sphi 0, %s27
      %s30 = sphi 0, %s28
      %s40 = sphi 0, %s42
      %s43 = sphi 0, %s40
      %s44 = sphi 0, %s43
      %s60 = sphi 0, %s44
      %s68 = sphi 0, %s70
      %s71 = sphi 0, %s68
      %s72 = sphi 0, %s71
      %s88 = sphi 0, %s72
      %s94 = sphi 0, %s96
      %s97 = sphi 0, %s94
      %s98 = sphi 0, %s97
      %s114 = sphi 0, %s98
      %s122 = sphi 0, %s124
      %s125 = sphi 0, %s122
      %s126 = sphi 0, %s125
      %s142 = sphi 0, %s126
      %s146 = sphi 0, %s146
      %s148 = sphi 0, %s146
      %s149 = sphi 0, %s148
      %s163 = sphi 0, %s149
      %s167 = sphi 0, %s167
      %s169 = sphi 0, %s167
      %s170 = sphi 0, %s169
      %s184 = sphi 0, %s170
      %s188 = sphi 0, %s188
      %s190 = sphi 0, %s188
      %s191 = sphi 0, %s190
      %s205 = sphi 0, %s191
      %s209 = sphi 0, %s209
      %s211 = sphi 0, %s209
      %s212 = sphi 0, %s211
      %s226 = sphi 0, %s212
      %s230 = sphi 0, %s230
      %s232 = sphi 0, %s230
      %s233 = sphi 0, %s232
      %s247 = sphi 0, %s233
      %s255 = sphi 0, %s257
      %s258 = sphi 0, %s255
      %s259 = sphi 0, %s258
      %s275 = sphi 0, %s259
    $region4: #{tpu_custom_call.1} parent=1 // loop_header_branch
      %21 = sbr.rel (%p19) target = $region8
    $region5: #{tpu_custom_call.1} parent=1 // loop_body
      %s23 = ssub.s32 %s18, 1
      %s24 = ssub.s32 %s18, 2
      %s31 = sadd.s32 1, %s26
      %p32 = scmp.ge.s32.totalorder %s31, 1
      %s33 = scalar_select %p32, 0, %s31
      %s34 = sadd.s32 1, %s25
      %s35 = scalar_select %p32, %s34, %s25
      %p36 = scmp.ge.s32.totalorder %s35, 2
      %s37 = scalar_select %p36, 0, %s35
      %s38 = ssub.s32 %s25, %s37
      %p39 = scmp.eq.s32.totalorder %s38, 0
      %s41 = sadd.s32 %s40, 1
      %s42 = scalar_select %p39, %s40, %s41
      %p45 = pneg %p39
      %p46 = scmp.eq.s32.totalorder %s18, 1
      %p47 = por %p45, %p46
      %p48 = scmp.ne.s32.totalorder %s40, %s43
      %p49 = scmp.eq.s32.totalorder %s18, 0
      %p50 = por %p48, %p49
      %p51 = scmp.ne.s32.totalorder %s40, %s43
      %p52 = scmp.eq.s32.totalorder %s23, 1
      %p53 = por %p51, %p52
      %p54 = scmp.ne.s32.totalorder %s43, %s44
      %p55 = scmp.eq.s32.totalorder %s23, 0
      %p56 = por %p54, %p55
      %p57 = scmp.ne.s32.totalorder %s43, %s44
      %p58 = scmp.eq.s32.totalorder %s24, 1
      %p59 = por %p57, %p58
      %p61 = scmp.ne.s32.totalorder %s44, %s60
      %p62 = scmp.eq.s32.totalorder %s24, 0
      %p63 = por %p61, %p62
      %s64 = ssub.s32 %s25, %s37
      %s65 = ssub.s32 %s26, %s33
      %s66 = sor.u32 %s64, %s65
      %p67 = scmp.eq.s32.totalorder %s66, 0
      %s69 = sadd.s32 %s68, 1
      %s70 = scalar_select %p67, %s68, %s69
      %p73 = pneg %p67
      %p74 = scmp.eq.s32.totalorder %s18, 1
      %p75 = por %p73, %p74
      %p76 = scmp.ne.s32.totalorder %s68, %s71
      %p77 = scmp.eq.s32.totalorder %s18, 0
      %p78 = por %p76, %p77
      %p79 = scmp.ne.s32.totalorder %s68, %s71
      %p80 = scmp.eq.s32.totalorder %s23, 1
      %p81 = por %p79, %p80
      %p82 = scmp.ne.s32.totalorder %s71, %s72
      %p83 = scmp.eq.s32.totalorder %s23, 0
      %p84 = por %p82, %p83
      %p85 = scmp.ne.s32.totalorder %s71, %s72
      %p86 = scmp.eq.s32.totalorder %s24, 1
      %p87 = por %p85, %p86
      %p89 = scmp.ne.s32.totalorder %s72, %s88
      %p90 = scmp.eq.s32.totalorder %s24, 0
      %p91 = por %p89, %p90
      %s92 = ssub.s32 %s25, %s37
      %p93 = scmp.eq.s32.totalorder %s92, 0
      %s95 = sadd.s32 %s94, 1
      %s96 = scalar_select %p93, %s94, %s95
      %p99 = pneg %p93
      %p100 = scmp.eq.s32.totalorder %s18, 1
      %p101 = por %p99, %p100
      %p102 = scmp.ne.s32.totalorder %s94, %s97
      %p103 = scmp.eq.s32.totalorder %s18, 0
      %p104 = por %p102, %p103
      %p105 = scmp.ne.s32.totalorder %s94, %s97
      %p106 = scmp.eq.s32.totalorder %s23, 1
      %p107 = por %p105, %p106
      %p108 = scmp.ne.s32.totalorder %s97, %s98
      %p109 = scmp.eq.s32.totalorder %s23, 0
      %p110 = por %p108, %p109
      %p111 = scmp.ne.s32.totalorder %s97, %s98
      %p112 = scmp.eq.s32.totalorder %s24, 1
      %p113 = por %p111, %p112
      %p115 = scmp.ne.s32.totalorder %s98, %s114
      %p116 = scmp.eq.s32.totalorder %s24, 0
      %p117 = por %p115, %p116
      %s118 = ssub.s32 %s25, %s37
      %s119 = ssub.s32 %s26, %s33
      %s120 = sor.u32 %s118, %s119
      %p121 = scmp.eq.s32.totalorder %s120, 0
      %s123 = sadd.s32 %s122, 1
      %s124 = scalar_select %p121, %s122, %s123
      %p127 = pneg %p121
      %p128 = scmp.eq.s32.totalorder %s18, 1
      %p129 = por %p127, %p128
      %p130 = scmp.ne.s32.totalorder %s122, %s125
      %p131 = scmp.eq.s32.totalorder %s18, 0
      %p132 = por %p130, %p131
      %p133 = scmp.ne.s32.totalorder %s122, %s125
      %p134 = scmp.eq.s32.totalorder %s23, 1
      %p135 = por %p133, %p134
      %p136 = scmp.ne.s32.totalorder %s125, %s126
      %p137 = scmp.eq.s32.totalorder %s23, 0
      %p138 = por %p136, %p137
      %p139 = scmp.ne.s32.totalorder %s125, %s126
      %p140 = scmp.eq.s32.totalorder %s24, 1
      %p141 = por %p139, %p140
      %p143 = scmp.ne.s32.totalorder %s126, %s142
      %p144 = scmp.eq.s32.totalorder %s24, 0
      %p145 = por %p143, %p144
      %s147 = sadd.s32 %s146, 1
      %p150 = scmp.eq.s32.totalorder %s18, 1
      %p151 = scmp.ne.s32.totalorder %s146, %s148
      %p152 = scmp.eq.s32.totalorder %s18, 0
      %p153 = por %p151, %p152
      %p154 = scmp.ne.s32.totalorder %s146, %s148
      %p155 = scmp.eq.s32.totalorder %s23, 1
      %p156 = por %p154, %p155
      %p157 = scmp.ne.s32.totalorder %s148, %s149
      %p158 = scmp.eq.s32.totalorder %s23, 0
      %p159 = por %p157, %p158
      %p160 = scmp.ne.s32.totalorder %s148, %s149
      %p161 = scmp.eq.s32.totalorder %s24, 1
      %p162 = por %p160, %p161
      %p164 = scmp.ne.s32.totalorder %s149, %s163
      %p165 = scmp.eq.s32.totalorder %s24, 0
      %p166 = por %p164, %p165
      %s168 = sadd.s32 %s167, 1
      %p171 = scmp.eq.s32.totalorder %s18, 1
      %p172 = scmp.ne.s32.totalorder %s167, %s169
      %p173 = scmp.eq.s32.totalorder %s18, 0
      %p174 = por %p172, %p173
      %p175 = scmp.ne.s32.totalorder %s167, %s169
      %p176 = scmp.eq.s32.totalorder %s23, 1
      %p177 = por %p175, %p176
      %p178 = scmp.ne.s32.totalorder %s169, %s170
      %p179 = scmp.eq.s32.totalorder %s23, 0
      %p180 = por %p178, %p179
      %p181 = scmp.ne.s32.totalorder %s169, %s170
      %p182 = scmp.eq.s32.totalorder %s24, 1
      %p183 = por %p181, %p182
      %p185 = scmp.ne.s32.totalorder %s170, %s184
      %p186 = scmp.eq.s32.totalorder %s24, 0
      %p187 = por %p185, %p186
      %s189 = sadd.s32 %s188, 1
      %p192 = scmp.eq.s32.totalorder %s18, 1
      %p193 = scmp.ne.s32.totalorder %s188, %s190
      %p194 = scmp.eq.s32.totalorder %s18, 0
      %p195 = por %p193, %p194
      %p196 = scmp.ne.s32.totalorder %s188, %s190
      %p197 = scmp.eq.s32.totalorder %s23, 1
      %p198 = por %p196, %p197
      %p199 = scmp.ne.s32.totalorder %s190, %s191
      %p200 = scmp.eq.s32.totalorder %s23, 0
      %p201 = por %p199, %p200
      %p202 = scmp.ne.s32.totalorder %s190, %s191
      %p203 = scmp.eq.s32.totalorder %s24, 1
      %p204 = por %p202, %p203
      %p206 = scmp.ne.s32.totalorder %s191, %s205
      %p207 = scmp.eq.s32.totalorder %s24, 0
      %p208 = por %p206, %p207
      %s210 = sadd.s32 %s209, 1
      %p213 = scmp.eq.s32.totalorder %s18, 1
      %p214 = scmp.ne.s32.totalorder %s209, %s211
      %p215 = scmp.eq.s32.totalorder %s18, 0
      %p216 = por %p214, %p215
      %p217 = scmp.ne.s32.totalorder %s209, %s211
      %p218 = scmp.eq.s32.totalorder %s23, 1
      %p219 = por %p217, %p218
      %p220 = scmp.ne.s32.totalorder %s211, %s212
      %p221 = scmp.eq.s32.totalorder %s23, 0
      %p222 = por %p220, %p221
      %p223 = scmp.ne.s32.totalorder %s211, %s212
      %p224 = scmp.eq.s32.totalorder %s24, 1
      %p225 = por %p223, %p224
      %p227 = scmp.ne.s32.totalorder %s212, %s226
      %p228 = scmp.eq.s32.totalorder %s24, 0
      %p229 = por %p227, %p228
      %s231 = sadd.s32 %s230, 1
      %p234 = scmp.eq.s32.totalorder %s18, 1
      %p235 = scmp.ne.s32.totalorder %s230, %s232
      %p236 = scmp.eq.s32.totalorder %s18, 0
      %p237 = por %p235, %p236
      %p238 = scmp.ne.s32.totalorder %s230, %s232
      %p239 = scmp.eq.s32.totalorder %s23, 1
      %p240 = por %p238, %p239
      %p241 = scmp.ne.s32.totalorder %s232, %s233
      %p242 = scmp.eq.s32.totalorder %s23, 0
      %p243 = por %p241, %p242
      %p244 = scmp.ne.s32.totalorder %s232, %s233
      %p245 = scmp.eq.s32.totalorder %s24, 1
      %p246 = por %p244, %p245
      %p248 = scmp.ne.s32.totalorder %s233, %s247
      %p249 = scmp.eq.s32.totalorder %s24, 0
      %p250 = por %p248, %p249
      %s251 = ssub.s32 %s25, %s37
      %s252 = ssub.s32 %s26, %s33
      %s253 = sor.u32 %s251, %s252
      %p254 = scmp.eq.s32.totalorder %s253, 0
      %s256 = sadd.s32 %s255, 1
      %s257 = scalar_select %p254, %s255, %s256
      %p260 = pneg %p254
      %p261 = scmp.eq.s32.totalorder %s18, 1
      %p262 = por %p260, %p261
      %p263 = scmp.ne.s32.totalorder %s255, %s258
      %p264 = scmp.eq.s32.totalorder %s18, 0
      %p265 = por %p263, %p264
      %p266 = scmp.ne.s32.totalorder %s255, %s258
      %p267 = scmp.eq.s32.totalorder %s23, 1
      %p268 = por %p266, %p267
      %p269 = scmp.ne.s32.totalorder %s258, %s259
      %p270 = scmp.eq.s32.totalorder %s23, 0
      %p271 = por %p269, %p270
      %p272 = scmp.ne.s32.totalorder %s258, %s259
      %p273 = scmp.eq.s32.totalorder %s24, 1
      %p274 = por %p272, %p273
      %p276 = scmp.ne.s32.totalorder %s259, %s275
      %p277 = scmp.eq.s32.totalorder %s24, 0
      %p278 = por %p276, %p277
      %p279 = scmp.le.s32.totalorder 1, %s18
      %p280 = scmp.lt.s32.totalorder %s18, 3
      %p281 = pnand %p279, %p280
      %p282 = pneg %p281
      // Predicated region
      $region9: #{tpu_custom_call.1} parent=5 // pred_check
        _
      $region10: #{tpu_custom_call.1} parent=5 // pred_check_branch
        %284 = sbr.rel (%p281) target = $region12
      $region11: #{tpu_custom_call.1} parent=5 // pred_region
        %s285 = ssub.s32 %s18, 1
        // Predicated region
        $region13: #{tpu_custom_call.1} parent=11 // pred_check
          %p286 = pneg %p159
        $region14: #{tpu_custom_call.1} parent=11 // pred_check_branch
          %288 = sbr.rel (%p286) target = $region16
        $region15: #{tpu_custom_call.1} parent=11 // pred_region
          _
        $region16: #{tpu_custom_call.1} parent=11 // pred_fallthru
          _
        // Predicated region
        $region17: #{tpu_custom_call.1} parent=11 // pred_check
          %p289 = pneg %p180
        $region18: #{tpu_custom_call.1} parent=11 // pred_check_branch
          %291 = sbr.rel (%p289) target = $region20
        $region19: #{tpu_custom_call.1} parent=11 // pred_region
          _
        $region20: #{tpu_custom_call.1} parent=11 // pred_fallthru
          _
        // Predicated region
        $region21: #{tpu_custom_call.1} parent=11 // pred_check
          %p292 = pneg %p201
        $region22: #{tpu_custom_call.1} parent=11 // pred_check_branch
          %294 = sbr.rel (%p292) target = $region24
        $region23: #{tpu_custom_call.1} parent=11 // pred_region
          _
        $region24: #{tpu_custom_call.1} parent=11 // pred_fallthru
          _
        // Predicated region
        $region25: #{tpu_custom_call.1} parent=11 // pred_check
          %p295 = pneg %p222
        $region26: #{tpu_custom_call.1} parent=11 // pred_check_branch
          %297 = sbr.rel (%p295) target = $region28
        $region27: #{tpu_custom_call.1} parent=11 // pred_region
          _
        $region28: #{tpu_custom_call.1} parent=11 // pred_fallthru
          _
        // Predicated region
        $region29: #{tpu_custom_call.1} parent=11 // pred_check
          %p298 = pneg %p243
        $region30: #{tpu_custom_call.1} parent=11 // pred_check_branch
          %300 = sbr.rel (%p298) target = $region32
        $region31: #{tpu_custom_call.1} parent=11 // pred_region
          _
        $region32: #{tpu_custom_call.1} parent=11 // pred_fallthru
          _
      $region12: #{tpu_custom_call.1} parent=5 // pred_fallthru
        _
      %p301 = scmp.lt.s32.totalorder %s18, 2
      // Predicated region
      $region33: #{tpu_custom_call.1} parent=5 // pred_check
        %p302 = pneg %p301
      $region34: #{tpu_custom_call.1} parent=5 // pred_check_branch
        %304 = sbr.rel (%p302) target = $region36
      $region35: #{tpu_custom_call.1} parent=5 // pred_region
        // Predicated region
        $region37: #{tpu_custom_call.1} parent=35 // pred_check
          %p305 = pneg %p50
        $region38: #{tpu_custom_call.1} parent=35 // pred_check_branch
          %307 = sbr.rel (%p305) target = $region40
        $region39: #{tpu_custom_call.1} parent=35 // pred_region
          %p308 = scmp.lt.s32.totalorder %s25, 1
          %s309 = scalar_select %p308, %s25, 1
          %s310 = smul.addr %s309, 32
          %s311 = smul.addr %s310, 8
          %s312 = scalar_lea.vmem %s0, %s311
        $region40: #{tpu_custom_call.1} parent=35 // pred_fallthru
          _
        // Predicated region
        $region41: #{tpu_custom_call.1} parent=35 // pred_check
          %p313 = pneg %p78
        $region42: #{tpu_custom_call.1} parent=35 // pred_check_branch
          %315 = sbr.rel (%p313) target = $region44
        $region43: #{tpu_custom_call.1} parent=35 // pred_region
          %s316 = smul.u32 2, %s26
          %p317 = scmp.lt.s32.totalorder %s25, 1
          %s318 = scalar_select %p317, %s25, 1
          %p319 = scmp.lt.s32.totalorder %s316, 1
          %s320 = scalar_select %p319, %s316, 1
          %s321 = smul.addr %s318, 2
          %s322 = sadd.s32 %s320, %s321
          %s323 = smul.addr %s322, 8
          %s324 = scalar_lea.vmem %s1, %s323
          %s325 = smul.u32 2, %s26
        $region44: #{tpu_custom_call.1} parent=35 // pred_fallthru
          _
        // Predicated region
        $region45: #{tpu_custom_call.1} parent=35 // pred_check
          %p326 = pneg %p104
        $region46: #{tpu_custom_call.1} parent=35 // pred_check_branch
          %328 = sbr.rel (%p326) target = $region48
        $region47: #{tpu_custom_call.1} parent=35 // pred_region
          %p329 = scmp.lt.s32.totalorder %s25, 1
          %s330 = scalar_select %p329, %s25, 1
          %s331 = smul.addr %s330, 2
          %s332 = smul.addr %s331, 8
          %s333 = scalar_lea.vmem %s2, %s332
        $region48: #{tpu_custom_call.1} parent=35 // pred_fallthru
          _
        // Predicated region
        $region49: #{tpu_custom_call.1} parent=35 // pred_check
          %p334 = pneg %p132
        $region50: #{tpu_custom_call.1} parent=35 // pred_check_branch
          %336 = sbr.rel (%p334) target = $region52
        $region51: #{tpu_custom_call.1} parent=35 // pred_region
          %s337 = smul.u32 2, %s26
          %p338 = scmp.lt.s32.totalorder %s25, 1
          %s339 = scalar_select %p338, %s25, 1
          %p340 = scmp.lt.s32.totalorder %s337, 1
          %s341 = scalar_select %p340, %s337, 1
          %s342 = smul.addr %s339, 2
          %s343 = sadd.s32 %s341, %s342
          %s344 = smul.addr %s343, 8
          %s345 = scalar_lea.vmem %s3, %s344
          %s346 = smul.u32 2, %s26
        $region52: #{tpu_custom_call.1} parent=35 // pred_fallthru
          _
      $region36: #{tpu_custom_call.1} parent=5 // pred_fallthru
        _
      %p347 = scmp.le.s32.totalorder 1, %s18
      %p348 = scmp.lt.s32.totalorder %s18, 3
      %p349 = pnand %p347, %p348
      %p350 = pneg %p349
      // Predicated region
      $region53: #{tpu_custom_call.1} parent=5 // pred_check
        _
      $region54: #{tpu_custom_call.1} parent=5 // pred_check_branch
        %352 = sbr.rel (%p349) target = $region56
      $region55: #{tpu_custom_call.1} parent=5 // pred_region
        %s353 = ssub.s32 %s18, 1
        %p354 = scmp.lt.s32.totalorder %s27, 1
        %s355 = scalar_select %p354, %s27, 1
        %s356 = smul.addr %s355, 32
        %s357 = smul.addr %s356, 8
        %s358 = scalar_lea.vmem %s0, %s357
        %p359 = pneg %p56
        %p360 = pneg %p53
        %s361 = smul.u32 2, %s28
        %p362 = scmp.lt.s32.totalorder %s27, 1
        %s363 = scalar_select %p362, %s27, 1
        %p364 = scmp.lt.s32.totalorder %s361, 1
        %s365 = scalar_select %p364, %s361, 1
        %s366 = smul.addr %s363, 2
        %s367 = sadd.s32 %s365, %s366
        %s368 = smul.addr %s367, 8
        %s369 = scalar_lea.vmem %s1, %s368
        %p370 = pneg %p84
        %p371 = pneg %p81
        %p372 = scmp.lt.s32.totalorder %s27, 1
        %s373 = scalar_select %p372, %s27, 1
        %s374 = smul.addr %s373, 2
        %s375 = smul.addr %s374, 8
        %s376 = scalar_lea.vmem %s2, %s375
        %p377 = pneg %p110
        %p378 = pneg %p107
        %s379 = smul.u32 2, %s28
        %p380 = scmp.lt.s32.totalorder %s27, 1
        %s381 = scalar_select %p380, %s27, 1
        %p382 = scmp.lt.s32.totalorder %s379, 1
        %s383 = scalar_select %p382, %s379, 1
        %s384 = smul.addr %s381, 2
        %s385 = sadd.s32 %s383, %s384
        %s386 = smul.addr %s385, 8
        %s387 = scalar_lea.vmem %s3, %s386
        %p388 = pneg %p138
        %p389 = pneg %p135
        %p390 = pneg %p159
        %p391 = pneg %p156
        %p392 = pneg %p180
        %p393 = pneg %p177
        %p394 = pneg %p201
        %p395 = pneg %p198
        %p396 = pneg %p222
        %p397 = pneg %p219
        %p398 = pneg %p243
        %p399 = pneg %p240
        %p400 = pneg %p271
        %p401 = pneg %p268
        %s402 = sand.u32 %s258, 1
        %s403 = scalar_lea.sflag [#allocation3], %s402
        %s404 = sand.u32 %s258, 1
        %s405 = smul.addr %s404, 64
        %s406 = scalar_lea.vmem [#allocation2], %s405
        %p407 = scmp.lt.s32.totalorder %s27, 1
        %s408 = scalar_select %p407, %s27, 1
        %s409 = smul.addr %s408, 32
        %s410 = smul.addr %s409, 8
        %s411 = scalar_lea.vmem %s0, %s410
        %s412 = smul.u32 2, %s28
        %p413 = scmp.lt.s32.totalorder %s27, 1
        %s414 = scalar_select %p413, %s27, 1
        %p415 = scmp.lt.s32.totalorder %s412, 1
        %s416 = scalar_select %p415, %s412, 1
        %s417 = smul.addr %s414, 2
        %s418 = sadd.s32 %s416, %s417
        %s419 = smul.addr %s418, 8
        %s420 = scalar_lea.vmem %s1, %s419
        %s421 = smul.u32 2, %s28
        %p422 = scmp.lt.s32.totalorder %s27, 1
        %s423 = scalar_select %p422, %s27, 1
        %s424 = smul.addr %s423, 2
        %s425 = smul.addr %s424, 8
        %s426 = scalar_lea.vmem %s2, %s425
        %s427 = smul.u32 2, %s28
        %p428 = scmp.lt.s32.totalorder %s27, 1
        %s429 = scalar_select %p428, %s27, 1
        %p430 = scmp.lt.s32.totalorder %s427, 1
        %s431 = scalar_select %p430, %s427, 1
        %s432 = smul.addr %s429, 2
        %s433 = sadd.s32 %s431, %s432
        %s434 = smul.addr %s433, 8
        %s435 = scalar_lea.vmem %s3, %s434
        %s436 = smul.u32 2, %s28
        %s437 = smul.u32 2, %s28
        %v438 = vld [vmem:[%s411] sm:$0xff]
        %v439 = vld [vmem:[%s411 + $0x8] sm:$0xff]
        %v440 = vld [vmem:[%s411 + $0x10] sm:$0xff]
        %v441 = vld [vmem:[%s411 + $0x18] sm:$0xff]
        %v442 = vld [vmem:[%s411 + $0x20] sm:$0xff]
        %v443 = vld [vmem:[%s411 + $0x28] sm:$0xff]
        %v444 = vld [vmem:[%s411 + $0x30] sm:$0xff]
        %v445 = vld [vmem:[%s411 + $0x38] sm:$0xff]
        %v446 = vld [vmem:[%s411 + $0x40] sm:$0xff]
        %v447 = vld [vmem:[%s411 + $0x48] sm:$0xff]
        %v448 = vld [vmem:[%s411 + $0x50] sm:$0xff]
        %v449 = vld [vmem:[%s411 + $0x58] sm:$0xff]
        %v450 = vld [vmem:[%s411 + $0x60] sm:$0xff]
        %v451 = vld [vmem:[%s411 + $0x68] sm:$0xff]
        %v452 = vld [vmem:[%s411 + $0x70] sm:$0xff]
        %v453 = vld [vmem:[%s411 + $0x78] sm:$0xff]
        %v454 = vld [vmem:[%s411 + $0x80] sm:$0xff]
        %v455 = vld [vmem:[%s411 + $0x88] sm:$0xff]
        %v456 = vld [vmem:[%s411 + $0x90] sm:$0xff]
        %v457 = vld [vmem:[%s411 + $0x98] sm:$0xff]
        %v458 = vld [vmem:[%s411 + $0xa0] sm:$0xff]
        %v459 = vld [vmem:[%s411 + $0xa8] sm:$0xff]
        %v460 = vld [vmem:[%s411 + $0xb0] sm:$0xff]
        %v461 = vld [vmem:[%s411 + $0xb8] sm:$0xff]
        %v462 = vld [vmem:[%s411 + $0xc0] sm:$0xff]
        %v463 = vld [vmem:[%s411 + $0xc8] sm:$0xff]
        %v464 = vld [vmem:[%s411 + $0xd0] sm:$0xff]
        %v465 = vld [vmem:[%s411 + $0xd8] sm:$0xff]
        %v466 = vld [vmem:[%s411 + $0xe0] sm:$0xff]
        %v467 = vld [vmem:[%s411 + $0xe8] sm:$0xff]
        %v468 = vld [vmem:[%s411 + $0xf0] sm:$0xff]
        %v469 = vld [vmem:[%s411 + $0xf8] sm:$0xff]
        %v470 = vld [vmem:[%s420] sm:$0xff]
        %v471 = vld [vmem:[%s420 + $0x8] sm:$0xff]
        %v472 = vld [vmem:[%s426] sm:$0xff]
        %v473 = vld [vmem:[%s426 + $0x8] sm:$0xff]
        %v474 = vld [vmem:[%s435] sm:$0xff]
        %v475 = vld [vmem:[%s435 + $0x8] sm:$0xff]
        %vm476 = vcmask 64512
        %v478 = vsel %vm476, %v438, 0
        %v481 = vsel %vm476, %v439, 0
        %v484 = vsel %vm476, %v440, 0
        %v487 = vsel %vm476, %v441, 0
        %v490 = vsel %vm476, %v442, 0
        %v493 = vsel %vm476, %v443, 0
        %v496 = vsel %vm476, %v444, 0
        %v499 = vsel %vm476, %v445, 0
        %v502 = vsel %vm476, %v446, 0
        %v505 = vsel %vm476, %v447, 0
        %v508 = vsel %vm476, %v448, 0
        %v511 = vsel %vm476, %v449, 0
        %v514 = vsel %vm476, %v450, 0
        %v517 = vsel %vm476, %v451, 0
        %v520 = vsel %vm476, %v452, 0
        %v523 = vsel %vm476, %v453, 0
        %v526 = vsel %vm476, %v454, 0
        %v529 = vsel %vm476, %v455, 0
        %v532 = vsel %vm476, %v456, 0
        %v535 = vsel %vm476, %v457, 0
        %v538 = vsel %vm476, %v458, 0
        %v541 = vsel %vm476, %v459, 0
        %v544 = vsel %vm476, %v460, 0
        %v547 = vsel %vm476, %v461, 0
        %v550 = vsel %vm476, %v462, 0
        %v553 = vsel %vm476, %v463, 0
        %v556 = vsel %vm476, %v464, 0
        %v559 = vsel %vm476, %v465, 0
        %v562 = vsel %vm476, %v466, 0
        %v565 = vsel %vm476, %v467, 0
        %v568 = vsel %vm476, %v468, 0
        %v571 = vsel %vm476, %v469, 0
        %573 = vmatprep.subr.mxu0 0.0
        %574 = vmatpush1.msra.mxu0 0.0
        %575 = vmatprep.subr.mxu0 0.0
        %576 = vmatpush1.msra.mxu0 0.0
        %577 = vmatprep.subr.mxu0 0.0
        %578 = vmatpush1.msra.mxu0 0.0
        %579 = vmatprep.subr.mxu0 0.0
        %580 = vmatpush1.msra.mxu0 0.0
        %581 = vmatprep.subr.mxu0 0.0
        %582 = vmatpush1.msra.mxu0 0.0
        %583 = vmatprep.subr.mxu0 0.0
        %584 = vmatpush1.msra.mxu0 0.0
        %585 = vmatprep.subr.mxu0 0.0
        %586 = vmatpush1.msra.mxu0 0.0
        %587 = vmatprep.subr.mxu0 0.0
        %588 = vmatpush1.msra.mxu0 0.0
        %589 = vmatprep.subr.mxu0 0.0
        %590 = vmatpush1.msra.mxu0 0.0
        %591 = vmatprep.subr.mxu0 0.0
        %592 = vmatpush1.msra.mxu0 0.0
        %593 = vmatprep.subr.mxu0 0.0
        %594 = vmatpush1.msra.mxu0 0.0
        %595 = vmatprep.subr.mxu0 0.0
        %596 = vmatpush1.msra.mxu0 0.0
        %597 = vmatprep.subr.mxu0 0.0
        %598 = vmatpush1.msra.mxu0 0.0
        %599 = vmatprep.subr.mxu0 0.0
        %600 = vmatpush1.msra.mxu0 0.0
        %601 = vmatprep.subr.mxu0 0.0
        %602 = vmatpush1.msra.mxu0 0.0
        %603 = vmatprep.subr.mxu0 %v471
        %604 = vmatpush1.msra.mxu0 %v470
        %605 = vmatprep.subr.mxu0 0.0
        %606 = vmatpush2.msra.mxu0 0.0
        %607 = vmatprep.subr.mxu0 0.0
        %608 = vmatpush2.msra.mxu0 0.0
        %609 = vmatprep.subr.mxu0 0.0
        %610 = vmatpush2.msra.mxu0 0.0
        %611 = vmatprep.subr.mxu0 0.0
        %612 = vmatpush2.msra.mxu0 0.0
        %613 = vmatprep.subr.mxu0 0.0
        %614 = vmatpush2.msra.mxu0 0.0
        %615 = vmatprep.subr.mxu0 0.0
        %616 = vmatpush2.msra.mxu0 0.0
        %617 = vmatprep.subr.mxu0 0.0
        %618 = vmatpush2.msra.mxu0 0.0
        %619 = vmatprep.subr.mxu0 0.0
        %620 = vmatpush2.msra.mxu0 0.0
        %621 = vmatprep.subr.mxu0 0.0
        %622 = vmatpush2.msra.mxu0 0.0
        %623 = vmatprep.subr.mxu0 0.0
        %624 = vmatpush2.msra.mxu0 0.0
        %625 = vmatprep.subr.mxu0 0.0
        %626 = vmatpush2.msra.mxu0 0.0
        %627 = vmatprep.subr.mxu0 0.0
        %628 = vmatpush2.msra.mxu0 0.0
        %629 = vmatprep.subr.mxu0 0.0
        %630 = vmatpush2.msra.mxu0 0.0
        %631 = vmatprep.subr.mxu0 0.0
        %632 = vmatpush2.msra.mxu0 0.0
        %633 = vmatprep.subr.mxu0 0.0
        %634 = vmatpush2.msra.mxu0 0.0
        %635 = vmatprep.subr.mxu0 0.0
        %636 = vmatpush2.msra.mxu0 0.0
        %637 = vmatprep.mubr.f32.mxu0 0.0
        %638 = vmatmul.mubr.f32.gmra.mxu0 %v478
        %v639 = vpop.f32.mrf.mxu0
        %v640 = vadd.f32 0.0, %v639
        %v641 = vpop.f32.mrf.mxu0
        %v642 = vadd.f32 0.0, %v641
        %643 = vmatprep.mubr.f32.mxu0 0.0
        %644 = vmatmul.mubr.f32.gmra.mxu0 %v481
        %v645 = vpop.f32.mrf.mxu0
        %v646 = vadd.f32 0.0, %v645
        %v647 = vpop.f32.mrf.mxu0
        %v648 = vadd.f32 0.0, %v647
        %649 = vmatprep.mubr.f32.mxu0 0.0
        %650 = vmatmul.mubr.f32.gmra.mxu0 %v484
        %v651 = vpop.f32.mrf.mxu0
        %v652 = vadd.f32 0.0, %v651
        %v653 = vpop.f32.mrf.mxu0
        %v654 = vadd.f32 0.0, %v653
        %655 = vmatprep.mubr.f32.mxu0 0.0
        %656 = vmatmul.mubr.f32.gmra.mxu0 %v487
        %v657 = vpop.f32.mrf.mxu0
        %v658 = vadd.f32 0.0, %v657
        %v659 = vpop.f32.mrf.mxu0
        %v660 = vadd.f32 0.0, %v659
        %661 = vmatprep.mubr.f32.mxu0 0.0
        %662 = vmatmul.mubr.f32.gmra.mxu0 %v490
        %v663 = vpop.f32.mrf.mxu0
        %v664 = vadd.f32 0.0, %v663
        %v665 = vpop.f32.mrf.mxu0
        %v666 = vadd.f32 0.0, %v665
        %667 = vmatprep.mubr.f32.mxu0 0.0
        %668 = vmatmul.mubr.f32.gmra.mxu0 %v493
        %v669 = vpop.f32.mrf.mxu0
        %v670 = vadd.f32 0.0, %v669
        %v671 = vpop.f32.mrf.mxu0
        %v672 = vadd.f32 0.0, %v671
        %673 = vmatprep.mubr.f32.mxu0 0.0
        %674 = vmatmul.mubr.f32.gmra.mxu0 %v496
        %v675 = vpop.f32.mrf.mxu0
        %v676 = vadd.f32 0.0, %v675
        %v677 = vpop.f32.mrf.mxu0
        %v678 = vadd.f32 0.0, %v677
        %679 = vmatprep.mubr.f32.mxu0 0.0
        %680 = vmatmul.mubr.f32.gmra.mxu0 %v499
        %v681 = vpop.f32.mrf.mxu0
        %v682 = vadd.f32 0.0, %v681
        %v683 = vpop.f32.mrf.mxu0
        %v684 = vadd.f32 0.0, %v683
        %685 = vmatprep.mubr.f32.mxu0 0.0
        %686 = vmatmul.mubr.f32.gmra.mxu0 %v502
        %v687 = vpop.f32.mrf.mxu0
        %v688 = vadd.f32 0.0, %v687
        %v689 = vpop.f32.mrf.mxu0
        %v690 = vadd.f32 0.0, %v689
        %691 = vmatprep.mubr.f32.mxu0 0.0
        %692 = vmatmul.mubr.f32.gmra.mxu0 %v505
        %v693 = vpop.f32.mrf.mxu0
        %v694 = vadd.f32 0.0, %v693
        %v695 = vpop.f32.mrf.mxu0
        %v696 = vadd.f32 0.0, %v695
        %697 = vmatprep.mubr.f32.mxu0 0.0
        %698 = vmatmul.mubr.f32.gmra.mxu0 %v508
        %v699 = vpop.f32.mrf.mxu0
        %v700 = vadd.f32 0.0, %v699
        %v701 = vpop.f32.mrf.mxu0
        %v702 = vadd.f32 0.0, %v701
        %703 = vmatprep.mubr.f32.mxu0 0.0
        %704 = vmatmul.mubr.f32.gmra.mxu0 %v511
        %v705 = vpop.f32.mrf.mxu0
        %v706 = vadd.f32 0.0, %v705
        %v707 = vpop.f32.mrf.mxu0
        %v708 = vadd.f32 0.0, %v707
        %709 = vmatprep.mubr.f32.mxu0 0.0
        %710 = vmatmul.mubr.f32.gmra.mxu0 %v514
        %v711 = vpop.f32.mrf.mxu0
        %v712 = vadd.f32 0.0, %v711
        %v713 = vpop.f32.mrf.mxu0
        %v714 = vadd.f32 0.0, %v713
        %715 = vmatprep.mubr.f32.mxu0 0.0
        %716 = vmatmul.mubr.f32.gmra.mxu0 %v517
        %v717 = vpop.f32.mrf.mxu0
        %v718 = vadd.f32 0.0, %v717
        %v719 = vpop.f32.mrf.mxu0
        %v720 = vadd.f32 0.0, %v719
        %721 = vmatprep.mubr.f32.mxu0 0.0
        %722 = vmatmul.mubr.f32.gmra.mxu0 %v520
        %v723 = vpop.f32.mrf.mxu0
        %v724 = vadd.f32 0.0, %v723
        %v725 = vpop.f32.mrf.mxu0
        %v726 = vadd.f32 0.0, %v725
        %727 = vmatprep.mubr.f32.mxu0 0.0
        %728 = vmatmul.mubr.f32.gmra.mxu0 %v523
        %v729 = vpop.f32.mrf.mxu0
        %v730 = vadd.f32 0.0, %v729
        %v731 = vpop.f32.mrf.mxu0
        %v732 = vadd.f32 0.0, %v731
        %733 = vmatprep.mubr.f32.mxu0 0.0
        %734 = vmatmul.mubr.f32.gmra.mxu0 %v526
        %v735 = vpop.f32.mrf.mxu0
        %v736 = vadd.f32 0.0, %v735
        %v737 = vpop.f32.mrf.mxu0
        %v738 = vadd.f32 0.0, %v737
        %739 = vmatprep.mubr.f32.mxu0 0.0
        %740 = vmatmul.mubr.f32.gmra.mxu0 %v529
        %v741 = vpop.f32.mrf.mxu0
        %v742 = vadd.f32 0.0, %v741
        %v743 = vpop.f32.mrf.mxu0
        %v744 = vadd.f32 0.0, %v743
        %745 = vmatprep.mubr.f32.mxu0 0.0
        %746 = vmatmul.mubr.f32.gmra.mxu0 %v532
        %v747 = vpop.f32.mrf.mxu0
        %v748 = vadd.f32 0.0, %v747
        %v749 = vpop.f32.mrf.mxu0
        %v750 = vadd.f32 0.0, %v749
        %751 = vmatprep.mubr.f32.mxu0 0.0
        %752 = vmatmul.mubr.f32.gmra.mxu0 %v535
        %v753 = vpop.f32.mrf.mxu0
        %v754 = vadd.f32 0.0, %v753
        %v755 = vpop.f32.mrf.mxu0
        %v756 = vadd.f32 0.0, %v755
        %757 = vmatprep.mubr.f32.mxu0 0.0
        %758 = vmatmul.mubr.f32.gmra.mxu0 %v538
        %v759 = vpop.f32.mrf.mxu0
        %v760 = vadd.f32 0.0, %v759
        %v761 = vpop.f32.mrf.mxu0
        %v762 = vadd.f32 0.0, %v761
        %763 = vmatprep.mubr.f32.mxu0 0.0
        %764 = vmatmul.mubr.f32.gmra.mxu0 %v541
        %v765 = vpop.f32.mrf.mxu0
        %v766 = vadd.f32 0.0, %v765
        %v767 = vpop.f32.mrf.mxu0
        %v768 = vadd.f32 0.0, %v767
        %769 = vmatprep.mubr.f32.mxu0 0.0
        %770 = vmatmul.mubr.f32.gmra.mxu0 %v544
        %v771 = vpop.f32.mrf.mxu0
        %v772 = vadd.f32 0.0, %v771
        %v773 = vpop.f32.mrf.mxu0
        %v774 = vadd.f32 0.0, %v773
        %775 = vmatprep.mubr.f32.mxu0 0.0
        %776 = vmatmul.mubr.f32.gmra.mxu0 %v547
        %v777 = vpop.f32.mrf.mxu0
        %v778 = vadd.f32 0.0, %v777
        %v779 = vpop.f32.mrf.mxu0
        %v780 = vadd.f32 0.0, %v779
        %781 = vmatprep.mubr.f32.mxu0 0.0
        %782 = vmatmul.mubr.f32.gmra.mxu0 %v550
        %v783 = vpop.f32.mrf.mxu0
        %v784 = vadd.f32 0.0, %v783
        %v785 = vpop.f32.mrf.mxu0
        %v786 = vadd.f32 0.0, %v785
        %787 = vmatprep.mubr.f32.mxu0 0.0
        %788 = vmatmul.mubr.f32.gmra.mxu0 %v553
        %v789 = vpop.f32.mrf.mxu0
        %v790 = vadd.f32 0.0, %v789
        %v791 = vpop.f32.mrf.mxu0
        %v792 = vadd.f32 0.0, %v791
        %793 = vmatprep.mubr.f32.mxu0 0.0
        %794 = vmatmul.mubr.f32.gmra.mxu0 %v556
        %v795 = vpop.f32.mrf.mxu0
        %v796 = vadd.f32 0.0, %v795
        %v797 = vpop.f32.mrf.mxu0
        %v798 = vadd.f32 0.0, %v797
        %799 = vmatprep.mubr.f32.mxu0 0.0
        %800 = vmatmul.mubr.f32.gmra.mxu0 %v559
        %v801 = vpop.f32.mrf.mxu0
        %v802 = vadd.f32 0.0, %v801
        %v803 = vpop.f32.mrf.mxu0
        %v804 = vadd.f32 0.0, %v803
        %805 = vmatprep.mubr.f32.mxu0 0.0
        %806 = vmatmul.mubr.f32.gmra.mxu0 %v562
        %v807 = vpop.f32.mrf.mxu0
        %v808 = vadd.f32 0.0, %v807
        %v809 = vpop.f32.mrf.mxu0
        %v810 = vadd.f32 0.0, %v809
        %811 = vmatprep.mubr.f32.mxu0 0.0
        %812 = vmatmul.mubr.f32.gmra.mxu0 %v565
        %v813 = vpop.f32.mrf.mxu0
        %v814 = vadd.f32 0.0, %v813
        %v815 = vpop.f32.mrf.mxu0
        %v816 = vadd.f32 0.0, %v815
        %817 = vmatprep.mubr.f32.mxu0 0.0
        %818 = vmatmul.mubr.f32.gmra.mxu0 %v568
        %v819 = vpop.f32.mrf.mxu0
        %v820 = vadd.f32 0.0, %v819
        %v821 = vpop.f32.mrf.mxu0
        %v822 = vadd.f32 0.0, %v821
        %823 = vmatprep.mubr.f32.mxu0 0.0
        %824 = vmatmul.mubr.f32.gmra.mxu0 %v571
        %v825 = vpop.f32.mrf.mxu0
        %v826 = vadd.f32 0.0, %v825
        %v827 = vpop.f32.mrf.mxu0
        %v828 = vadd.f32 0.0, %v827
        %829 = vdwg.mxu0
        %v830 = vmin.f32 %v640, %v652
        %v831 = vmin.f32 %v646, %v658
        %v832 = vmin.f32 %v830, %v664
        %v833 = vmin.f32 %v831, %v670
        %v834 = vmin.f32 %v832, %v676
        %v835 = vmin.f32 %v833, %v682
        %v836 = vmin.f32 %v834, %v688
        %v837 = vmin.f32 %v835, %v694
        %v838 = vmin.f32 %v836, %v700
        %v839 = vmin.f32 %v837, %v706
        %v840 = vmin.f32 %v838, %v712
        %v841 = vmin.f32 %v839, %v718
        %v842 = vmin.f32 %v840, %v724
        %v843 = vmin.f32 %v841, %v730
        %v844 = vmin.f32 %v842, %v736
        %v845 = vmin.f32 %v843, %v742
        %v846 = vmin.f32 %v844, %v748
        %v847 = vmin.f32 %v845, %v754
        %v848 = vmin.f32 %v846, %v760
        %v849 = vmin.f32 %v847, %v766
        %v850 = vmin.f32 %v848, %v772
        %v851 = vmin.f32 %v849, %v778
        %v852 = vmin.f32 %v850, %v784
        %v853 = vmin.f32 %v851, %v790
        %v854 = vmin.f32 %v852, %v796
        %v855 = vmin.f32 %v853, %v802
        %v856 = vmin.f32 %v854, %v808
        %v857 = vmin.f32 %v855, %v814
        %v858 = vmin.f32 %v856, %v820
        %v859 = vmin.f32 %v857, %v826
        %v860 = vmin.f32 %v858, %v859
        %v861 = vrot.slane %v860, 4
        %v862 = vmin.f32 %v860, %v861
        %v863 = vrot.slane %v862, 2
        %v864 = vmin.f32 %v862, %v863
        %v865 = vrot.slane %v864, 1
        %v866 = vmin.f32 %v864, %v865
        %v867 = vmin.f32 %v642, %v654
        %v868 = vmin.f32 %v648, %v660
        %v869 = vmin.f32 %v867, %v666
        %v870 = vmin.f32 %v868, %v672
        %v871 = vmin.f32 %v869, %v678
        %v872 = vmin.f32 %v870, %v684
        %v873 = vmin.f32 %v871, %v690
        %v874 = vmin.f32 %v872, %v696
        %v875 = vmin.f32 %v873, %v702
        %v876 = vmin.f32 %v874, %v708
        %v877 = vmin.f32 %v875, %v714
        %v878 = vmin.f32 %v876, %v720
        %v879 = vmin.f32 %v877, %v726
        %v880 = vmin.f32 %v878, %v732
        %v881 = vmin.f32 %v879, %v738
        %v882 = vmin.f32 %v880, %v744
        %v883 = vmin.f32 %v881, %v750
        %v884 = vmin.f32 %v882, %v756
        %v885 = vmin.f32 %v883, %v762
        %v886 = vmin.f32 %v884, %v768
        %v887 = vmin.f32 %v885, %v774
        %v888 = vmin.f32 %v886, %v780
        %v889 = vmin.f32 %v887, %v786
        %v890 = vmin.f32 %v888, %v792
        %v891 = vmin.f32 %v889, %v798
        %v892 = vmin.f32 %v890, %v804
        %v893 = vmin.f32 %v891, %v810
        %v894 = vmin.f32 %v892, %v816
        %v895 = vmin.f32 %v893, %v822
        %v896 = vmin.f32 %v894, %v828
        %v897 = vmin.f32 %v895, %v896
        %v898 = vrot.slane %v897, 4
        %v899 = vmin.f32 %v897, %v898
        %v900 = vrot.slane %v899, 2
        %v901 = vmin.f32 %v899, %v900
        %v902 = vrot.slane %v901, 1
        %v903 = vmin.f32 %v901, %v902
        %v904 = vmax.f32 %v866, 0.0
        %v905 = vmax.f32 %v903, 0.0
        %v906 = vrsqrt.pop %v904
        %v907 = vmul.f32 %v904, %v906
        %vm908 = vcmp.eq.f32.partialorder %v904, inf
        %v909 = vsel %vm908, %v904, %v907
        %vm910 = vcmp.eq.f32.partialorder %v904, 0.0
        %v911 = vand.u32 %v904, 2147483648
        %v912 = vsel %vm910, %v911, %v909
        %v913 = vrsqrt.pop %v905
        %v914 = vmul.f32 %v905, %v913
        %vm915 = vcmp.eq.f32.partialorder %v905, inf
        %v916 = vsel %vm915, %v905, %v914
        %vm917 = vcmp.eq.f32.partialorder %v905, 0.0
        %v918 = vand.u32 %v905, 2147483648
        %v919 = vsel %vm917, %v918, %v916
        %v920 = vadd.f32 %v912, 1e-10
        %v921 = vadd.f32 %v919, 1e-10
        %v922 = vrcp.pop %v920
        %v923 = vrcp.pop %v921
        %vm924 = vcmp.le.f32.partialorder %v640, %v866
        %vm925 = vcmp.le.f32.partialorder %v642, %v903
        %vm926 = vcmp.le.f32.partialorder %v646, %v866
        %vm927 = vcmp.le.f32.partialorder %v648, %v903
        %vm928 = vcmp.le.f32.partialorder %v652, %v866
        %vm929 = vcmp.le.f32.partialorder %v654, %v903
        %vm930 = vcmp.le.f32.partialorder %v658, %v866
        %vm931 = vcmp.le.f32.partialorder %v660, %v903
        %vm932 = vcmp.le.f32.partialorder %v664, %v866
        %vm933 = vcmp.le.f32.partialorder %v666, %v903
        %vm934 = vcmp.le.f32.partialorder %v670, %v866
        %vm935 = vcmp.le.f32.partialorder %v672, %v903
        %vm936 = vcmp.le.f32.partialorder %v676, %v866
        %vm937 = vcmp.le.f32.partialorder %v678, %v903
        %vm938 = vcmp.le.f32.partialorder %v682, %v866
        %vm939 = vcmp.le.f32.partialorder %v684, %v903
        %vm940 = vcmp.le.f32.partialorder %v688, %v866
        %vm941 = vcmp.le.f32.partialorder %v690, %v903
        %vm942 = vcmp.le.f32.partialorder %v694, %v866
        %vm943 = vcmp.le.f32.partialorder %v696, %v903
        %vm944 = vcmp.le.f32.partialorder %v700, %v866
        %vm945 = vcmp.le.f32.partialorder %v702, %v903
        %vm946 = vcmp.le.f32.partialorder %v706, %v866
        %vm947 = vcmp.le.f32.partialorder %v708, %v903
        %vm948 = vcmp.le.f32.partialorder %v712, %v866
        %vm949 = vcmp.le.f32.partialorder %v714, %v903
        %vm950 = vcmp.le.f32.partialorder %v718, %v866
        %vm951 = vcmp.le.f32.partialorder %v720, %v903
        %vm952 = vcmp.le.f32.partialorder %v724, %v866
        %vm953 = vcmp.le.f32.partialorder %v726, %v903
        %vm954 = vcmp.le.f32.partialorder %v730, %v866
        %vm955 = vcmp.le.f32.partialorder %v732, %v903
        %vm956 = vcmp.le.f32.partialorder %v736, %v866
        %vm957 = vcmp.le.f32.partialorder %v738, %v903
        %vm958 = vcmp.le.f32.partialorder %v742, %v866
        %vm959 = vcmp.le.f32.partialorder %v744, %v903
        %vm960 = vcmp.le.f32.partialorder %v748, %v866
        %vm961 = vcmp.le.f32.partialorder %v750, %v903
        %vm962 = vcmp.le.f32.partialorder %v754, %v866
        %vm963 = vcmp.le.f32.partialorder %v756, %v903
        %vm964 = vcmp.le.f32.partialorder %v760, %v866
        %vm965 = vcmp.le.f32.partialorder %v762, %v903
        %vm966 = vcmp.le.f32.partialorder %v766, %v866
        %vm967 = vcmp.le.f32.partialorder %v768, %v903
        %vm968 = vcmp.le.f32.partialorder %v772, %v866
        %vm969 = vcmp.le.f32.partialorder %v774, %v903
        %vm970 = vcmp.le.f32.partialorder %v778, %v866
        %vm971 = vcmp.le.f32.partialorder %v780, %v903
        %vm972 = vcmp.le.f32.partialorder %v784, %v866
        %vm973 = vcmp.le.f32.partialorder %v786, %v903
        %vm974 = vcmp.le.f32.partialorder %v790, %v866
        %vm975 = vcmp.le.f32.partialorder %v792, %v903
        %vm976 = vcmp.le.f32.partialorder %v796, %v866
        %vm977 = vcmp.le.f32.partialorder %v798, %v903
        %vm978 = vcmp.le.f32.partialorder %v802, %v866
        %vm979 = vcmp.le.f32.partialorder %v804, %v903
        %vm980 = vcmp.le.f32.partialorder %v808, %v866
        %vm981 = vcmp.le.f32.partialorder %v810, %v903
        %vm982 = vcmp.le.f32.partialorder %v814, %v866
        %vm983 = vcmp.le.f32.partialorder %v816, %v903
        %vm984 = vcmp.le.f32.partialorder %v820, %v866
        %vm985 = vcmp.le.f32.partialorder %v822, %v903
        %vm986 = vcmp.le.f32.partialorder %v826, %v866
        %vm987 = vcmp.le.f32.partialorder %v828, %v903
        %v988 = vsel %vm924, %v922, 0.0
        %v989 = vsel %vm925, %v923, 0.0
        %v990 = vsel %vm926, %v922, 0.0
        %v991 = vsel %vm927, %v923, 0.0
        %v992 = vsel %vm928, %v922, 0.0
        %v993 = vsel %vm929, %v923, 0.0
        %v994 = vsel %vm930, %v922, 0.0
        %v995 = vsel %vm931, %v923, 0.0
        %v996 = vsel %vm932, %v922, 0.0
        %v997 = vsel %vm933, %v923, 0.0
        %v998 = vsel %vm934, %v922, 0.0
        %v999 = vsel %vm935, %v923, 0.0
        %v1000 = vsel %vm936, %v922, 0.0
        %v1001 = vsel %vm937, %v923, 0.0
        %v1002 = vsel %vm938, %v922, 0.0
        %v1003 = vsel %vm939, %v923, 0.0
        %v1004 = vsel %vm940, %v922, 0.0
        %v1005 = vsel %vm941, %v923, 0.0
        %v1006 = vsel %vm942, %v922, 0.0
        %v1007 = vsel %vm943, %v923, 0.0
        %v1008 = vsel %vm944, %v922, 0.0
        %v1009 = vsel %vm945, %v923, 0.0
        %v1010 = vsel %vm946, %v922, 0.0
        %v1011 = vsel %vm947, %v923, 0.0
        %v1012 = vsel %vm948, %v922, 0.0
        %v1013 = vsel %vm949, %v923, 0.0
        %v1014 = vsel %vm950, %v922, 0.0
        %v1015 = vsel %vm951, %v923, 0.0
        %v1016 = vsel %vm952, %v922, 0.0
        %v1017 = vsel %vm953, %v923, 0.0
        %v1018 = vsel %vm954, %v922, 0.0
        %v1019 = vsel %vm955, %v923, 0.0
        %v1020 = vsel %vm956, %v922, 0.0
        %v1021 = vsel %vm957, %v923, 0.0
        %v1022 = vsel %vm958, %v922, 0.0
        %v1023 = vsel %vm959, %v923, 0.0
        %v1024 = vsel %vm960, %v922, 0.0
        %v1025 = vsel %vm961, %v923, 0.0
        %v1026 = vsel %vm962, %v922, 0.0
        %v1027 = vsel %vm963, %v923, 0.0
        %v1028 = vsel %vm964, %v922, 0.0
        %v1029 = vsel %vm965, %v923, 0.0
        %v1030 = vsel %vm966, %v922, 0.0
        %v1031 = vsel %vm967, %v923, 0.0
        %v1032 = vsel %vm968, %v922, 0.0
        %v1033 = vsel %vm969, %v923, 0.0
        %v1034 = vsel %vm970, %v922, 0.0
        %v1035 = vsel %vm971, %v923, 0.0
        %v1036 = vsel %vm972, %v922, 0.0
        %v1037 = vsel %vm973, %v923, 0.0
        %v1038 = vsel %vm974, %v922, 0.0
        %v1039 = vsel %vm975, %v923, 0.0
        %v1040 = vsel %vm976, %v922, 0.0
        %v1041 = vsel %vm977, %v923, 0.0
        %v1042 = vsel %vm978, %v922, 0.0
        %v1043 = vsel %vm979, %v923, 0.0
        %v1044 = vsel %vm980, %v922, 0.0
        %v1045 = vsel %vm981, %v923, 0.0
        %v1046 = vsel %vm982, %v922, 0.0
        %v1047 = vsel %vm983, %v923, 0.0
        %v1048 = vsel %vm984, %v922, 0.0
        %v1049 = vsel %vm985, %v923, 0.0
        %v1050 = vsel %vm986, %v922, 0.0
        %v1051 = vsel %vm987, %v923, 0.0
        %v1052 = vsel %vm924, 3e+38, %v640
        %v1053 = vsel %vm925, 3e+38, %v642
        %v1054 = vsel %vm926, 3e+38, %v646
        %v1055 = vsel %vm927, 3e+38, %v648
        %v1056 = vsel %vm928, 3e+38, %v652
        %v1057 = vsel %vm929, 3e+38, %v654
        %v1058 = vsel %vm930, 3e+38, %v658
        %v1059 = vsel %vm931, 3e+38, %v660
        %v1060 = vsel %vm932, 3e+38, %v664
        %v1061 = vsel %vm933, 3e+38, %v666
        %v1062 = vsel %vm934, 3e+38, %v670
        %v1063 = vsel %vm935, 3e+38, %v672
        %v1064 = vsel %vm936, 3e+38, %v676
        %v1065 = vsel %vm937, 3e+38, %v678
        %v1066 = vsel %vm938, 3e+38, %v682
        %v1067 = vsel %vm939, 3e+38, %v684
        %v1068 = vsel %vm940, 3e+38, %v688
        %v1069 = vsel %vm941, 3e+38, %v690
        %v1070 = vsel %vm942, 3e+38, %v694
        %v1071 = vsel %vm943, 3e+38, %v696
        %v1072 = vsel %vm944, 3e+38, %v700
        %v1073 = vsel %vm945, 3e+38, %v702
        %v1074 = vsel %vm946, 3e+38, %v706
        %v1075 = vsel %vm947, 3e+38, %v708
        %v1076 = vsel %vm948, 3e+38, %v712
        %v1077 = vsel %vm949, 3e+38, %v714
        %v1078 = vsel %vm950, 3e+38, %v718
        %v1079 = vsel %vm951, 3e+38, %v720
        %v1080 = vsel %vm952, 3e+38, %v724
        %v1081 = vsel %vm953, 3e+38, %v726
        %v1082 = vsel %vm954, 3e+38, %v730
        %v1083 = vsel %vm955, 3e+38, %v732
        %v1084 = vsel %vm956, 3e+38, %v736
        %v1085 = vsel %vm957, 3e+38, %v738
        %v1086 = vsel %vm958, 3e+38, %v742
        %v1087 = vsel %vm959, 3e+38, %v744
        %v1088 = vsel %vm960, 3e+38, %v748
        %v1089 = vsel %vm961, 3e+38, %v750
        %v1090 = vsel %vm962, 3e+38, %v754
        %v1091 = vsel %vm963, 3e+38, %v756
        %v1092 = vsel %vm964, 3e+38, %v760
        %v1093 = vsel %vm965, 3e+38, %v762
        %v1094 = vsel %vm966, 3e+38, %v766
        %v1095 = vsel %vm967, 3e+38, %v768
        %v1096 = vsel %vm968, 3e+38, %v772
        %v1097 = vsel %vm969, 3e+38, %v774
        %v1098 = vsel %vm970, 3e+38, %v778
        %v1099 = vsel %vm971, 3e+38, %v780
        %v1100 = vsel %vm972, 3e+38, %v784
        %v1101 = vsel %vm973, 3e+38, %v786
        %v1102 = vsel %vm974, 3e+38, %v790
        %v1103 = vsel %vm975, 3e+38, %v792
        %v1104 = vsel %vm976, 3e+38, %v796
        %v1105 = vsel %vm977, 3e+38, %v798
        %v1106 = vsel %vm978, 3e+38, %v802
        %v1107 = vsel %vm979, 3e+38, %v804
        %v1108 = vsel %vm980, 3e+38, %v808
        %v1109 = vsel %vm981, 3e+38, %v810
        %v1110 = vsel %vm982, 3e+38, %v814
        %v1111 = vsel %vm983, 3e+38, %v816
        %v1112 = vsel %vm984, 3e+38, %v820
        %v1113 = vsel %vm985, 3e+38, %v822
        %v1114 = vsel %vm986, 3e+38, %v826
        %v1115 = vsel %vm987, 3e+38, %v828
        %v1116 = vmin.f32 %v1052, %v1056
        %v1117 = vmin.f32 %v1054, %v1058
        %v1118 = vmin.f32 %v1116, %v1060
        %v1119 = vmin.f32 %v1117, %v1062
        %v1120 = vmin.f32 %v1118, %v1064
        %v1121 = vmin.f32 %v1119, %v1066
        %v1122 = vmin.f32 %v1120, %v1068
        %v1123 = vmin.f32 %v1121, %v1070
        %v1124 = vmin.f32 %v1122, %v1072
        %v1125 = vmin.f32 %v1123, %v1074
        %v1126 = vmin.f32 %v1124, %v1076
        %v1127 = vmin.f32 %v1125, %v1078
        %v1128 = vmin.f32 %v1126, %v1080
        %v1129 = vmin.f32 %v1127, %v1082
        %v1130 = vmin.f32 %v1128, %v1084
        %v1131 = vmin.f32 %v1129, %v1086
        %v1132 = vmin.f32 %v1130, %v1088
        %v1133 = vmin.f32 %v1131, %v1090
        %v1134 = vmin.f32 %v1132, %v1092
        %v1135 = vmin.f32 %v1133, %v1094
        %v1136 = vmin.f32 %v1134, %v1096
        %v1137 = vmin.f32 %v1135, %v1098
        %v1138 = vmin.f32 %v1136, %v1100
        %v1139 = vmin.f32 %v1137, %v1102
        %v1140 = vmin.f32 %v1138, %v1104
        %v1141 = vmin.f32 %v1139, %v1106
        %v1142 = vmin.f32 %v1140, %v1108
        %v1143 = vmin.f32 %v1141, %v1110
        %v1144 = vmin.f32 %v1142, %v1112
        %v1145 = vmin.f32 %v1143, %v1114
        %v1146 = vmin.f32 %v1144, %v1145
        %v1147 = vrot.slane %v1146, 4
        %v1148 = vmin.f32 %v1146, %v1147
        %v1149 = vrot.slane %v1148, 2
        %v1150 = vmin.f32 %v1148, %v1149
        %v1151 = vrot.slane %v1150, 1
        %v1152 = vmin.f32 %v1150, %v1151
        %v1153 = vmin.f32 %v1053, %v1057
        %v1154 = vmin.f32 %v1055, %v1059
        %v1155 = vmin.f32 %v1153, %v1061
        %v1156 = vmin.f32 %v1154, %v1063
        %v1157 = vmin.f32 %v1155, %v1065
        %v1158 = vmin.f32 %v1156, %v1067
        %v1159 = vmin.f32 %v1157, %v1069
        %v1160 = vmin.f32 %v1158, %v1071
        %v1161 = vmin.f32 %v1159, %v1073
        %v1162 = vmin.f32 %v1160, %v1075
        %v1163 = vmin.f32 %v1161, %v1077
        %v1164 = vmin.f32 %v1162, %v1079
        %v1165 = vmin.f32 %v1163, %v1081
        %v1166 = vmin.f32 %v1164, %v1083
        %v1167 = vmin.f32 %v1165, %v1085
        %v1168 = vmin.f32 %v1166, %v1087
        %v1169 = vmin.f32 %v1167, %v1089
        %v1170 = vmin.f32 %v1168, %v1091
        %v1171 = vmin.f32 %v1169, %v1093
        %v1172 = vmin.f32 %v1170, %v1095
        %v1173 = vmin.f32 %v1171, %v1097
        %v1174 = vmin.f32 %v1172, %v1099
        %v1175 = vmin.f32 %v1173, %v1101
        %v1176 = vmin.f32 %v1174, %v1103
        %v1177 = vmin.f32 %v1175, %v1105
        %v1178 = vmin.f32 %v1176, %v1107
        %v1179 = vmin.f32 %v1177, %v1109
        %v1180 = vmin.f32 %v1178, %v1111
        %v1181 = vmin.f32 %v1179, %v1113
        %v1182 = vmin.f32 %v1180, %v1115
        %v1183 = vmin.f32 %v1181, %v1182
        %v1184 = vrot.slane %v1183, 4
        %v1185 = vmin.f32 %v1183, %v1184
        %v1186 = vrot.slane %v1185, 2
        %v1187 = vmin.f32 %v1185, %v1186
        %v1188 = vrot.slane %v1187, 1
        %v1189 = vmin.f32 %v1187, %v1188
        %v1190 = vmax.f32 %v1152, 0.0
        %v1191 = vmax.f32 %v1189, 0.0
        %v1192 = vrsqrt.pop %v1190
        %v1193 = vmul.f32 %v1190, %v1192
        %vm1194 = vcmp.eq.f32.partialorder %v1190, inf
        %v1195 = vsel %vm1194, %v1190, %v1193
        %vm1196 = vcmp.eq.f32.partialorder %v1190, 0.0
        %v1197 = vand.u32 %v1190, 2147483648
        %v1198 = vsel %vm1196, %v1197, %v1195
        %v1199 = vrsqrt.pop %v1191
        %v1200 = vmul.f32 %v1191, %v1199
        %vm1201 = vcmp.eq.f32.partialorder %v1191, inf
        %v1202 = vsel %vm1201, %v1191, %v1200
        %vm1203 = vcmp.eq.f32.partialorder %v1191, 0.0
        %v1204 = vand.u32 %v1191, 2147483648
        %v1205 = vsel %vm1203, %v1204, %v1202
        %v1206 = vadd.f32 %v1198, 1e-10
        %v1207 = vadd.f32 %v1205, 1e-10
        %v1208 = vrcp.pop %v1206
        %v1209 = vrcp.pop %v1207
        %vm1210 = vcmp.le.f32.partialorder %v1052, %v1152
        %vm1211 = vcmp.le.f32.partialorder %v1053, %v1189
        %vm1212 = vcmp.le.f32.partialorder %v1054, %v1152
        %vm1213 = vcmp.le.f32.partialorder %v1055, %v1189
        %vm1214 = vcmp.le.f32.partialorder %v1056, %v1152
        %vm1215 = vcmp.le.f32.partialorder %v1057, %v1189
        %vm1216 = vcmp.le.f32.partialorder %v1058, %v1152
        %vm1217 = vcmp.le.f32.partialorder %v1059, %v1189
        %vm1218 = vcmp.le.f32.partialorder %v1060, %v1152
        %vm1219 = vcmp.le.f32.partialorder %v1061, %v1189
        %vm1220 = vcmp.le.f32.partialorder %v1062, %v1152
        %vm1221 = vcmp.le.f32.partialorder %v1063, %v1189
        %vm1222 = vcmp.le.f32.partialorder %v1064, %v1152
        %vm1223 = vcmp.le.f32.partialorder %v1065, %v1189
        %vm1224 = vcmp.le.f32.partialorder %v1066, %v1152
        %vm1225 = vcmp.le.f32.partialorder %v1067, %v1189
        %vm1226 = vcmp.le.f32.partialorder %v1068, %v1152
        %vm1227 = vcmp.le.f32.partialorder %v1069, %v1189
        %vm1228 = vcmp.le.f32.partialorder %v1070, %v1152
        %vm1229 = vcmp.le.f32.partialorder %v1071, %v1189
        %vm1230 = vcmp.le.f32.partialorder %v1072, %v1152
        %vm1231 = vcmp.le.f32.partialorder %v1073, %v1189
        %vm1232 = vcmp.le.f32.partialorder %v1074, %v1152
        %vm1233 = vcmp.le.f32.partialorder %v1075, %v1189
        %vm1234 = vcmp.le.f32.partialorder %v1076, %v1152
        %vm1235 = vcmp.le.f32.partialorder %v1077, %v1189
        %vm1236 = vcmp.le.f32.partialorder %v1078, %v1152
        %vm1237 = vcmp.le.f32.partialorder %v1079, %v1189
        %vm1238 = vcmp.le.f32.partialorder %v1080, %v1152
        %vm1239 = vcmp.le.f32.partialorder %v1081, %v1189
        %vm1240 = vcmp.le.f32.partialorder %v1082, %v1152
        %vm1241 = vcmp.le.f32.partialorder %v1083, %v1189
        %vm1242 = vcmp.le.f32.partialorder %v1084, %v1152
        %vm1243 = vcmp.le.f32.partialorder %v1085, %v1189
        %vm1244 = vcmp.le.f32.partialorder %v1086, %v1152
        %vm1245 = vcmp.le.f32.partialorder %v1087, %v1189
        %vm1246 = vcmp.le.f32.partialorder %v1088, %v1152
        %vm1247 = vcmp.le.f32.partialorder %v1089, %v1189
        %vm1248 = vcmp.le.f32.partialorder %v1090, %v1152
        %vm1249 = vcmp.le.f32.partialorder %v1091, %v1189
        %vm1250 = vcmp.le.f32.partialorder %v1092, %v1152
        %vm1251 = vcmp.le.f32.partialorder %v1093, %v1189
        %vm1252 = vcmp.le.f32.partialorder %v1094, %v1152
        %vm1253 = vcmp.le.f32.partialorder %v1095, %v1189
        %vm1254 = vcmp.le.f32.partialorder %v1096, %v1152
        %vm1255 = vcmp.le.f32.partialorder %v1097, %v1189
        %vm1256 = vcmp.le.f32.partialorder %v1098, %v1152
        %vm1257 = vcmp.le.f32.partialorder %v1099, %v1189
        %vm1258 = vcmp.le.f32.partialorder %v1100, %v1152
        %vm1259 = vcmp.le.f32.partialorder %v1101, %v1189
        %vm1260 = vcmp.le.f32.partialorder %v1102, %v1152
        %vm1261 = vcmp.le.f32.partialorder %v1103, %v1189
        %vm1262 = vcmp.le.f32.partialorder %v1104, %v1152
        %vm1263 = vcmp.le.f32.partialorder %v1105, %v1189
        %vm1264 = vcmp.le.f32.partialorder %v1106, %v1152
        %vm1265 = vcmp.le.f32.partialorder %v1107, %v1189
        %vm1266 = vcmp.le.f32.partialorder %v1108, %v1152
        %vm1267 = vcmp.le.f32.partialorder %v1109, %v1189
        %vm1268 = vcmp.le.f32.partialorder %v1110, %v1152
        %vm1269 = vcmp.le.f32.partialorder %v1111, %v1189
        %vm1270 = vcmp.le.f32.partialorder %v1112, %v1152
        %vm1271 = vcmp.le.f32.partialorder %v1113, %v1189
        %vm1272 = vcmp.le.f32.partialorder %v1114, %v1152
        %vm1273 = vcmp.le.f32.partialorder %v1115, %v1189
        %v1274 = vsel %vm1210, %v1208, %v988
        %v1275 = vsel %vm1211, %v1209, %v989
        %v1276 = vsel %vm1212, %v1208, %v990
        %v1277 = vsel %vm1213, %v1209, %v991
        %v1278 = vsel %vm1214, %v1208, %v992
        %v1279 = vsel %vm1215, %v1209, %v993
        %v1280 = vsel %vm1216, %v1208, %v994
        %v1281 = vsel %vm1217, %v1209, %v995
        %v1282 = vsel %vm1218, %v1208, %v996
        %v1283 = vsel %vm1219, %v1209, %v997
        %v1284 = vsel %vm1220, %v1208, %v998
        %v1285 = vsel %vm1221, %v1209, %v999
        %v1286 = vsel %vm1222, %v1208, %v1000
        %v1287 = vsel %vm1223, %v1209, %v1001
        %v1288 = vsel %vm1224, %v1208, %v1002
        %v1289 = vsel %vm1225, %v1209, %v1003
        %v1290 = vsel %vm1226, %v1208, %v1004
        %v1291 = vsel %vm1227, %v1209, %v1005
        %v1292 = vsel %vm1228, %v1208, %v1006
        %v1293 = vsel %vm1229, %v1209, %v1007
        %v1294 = vsel %vm1230, %v1208, %v1008
        %v1295 = vsel %vm1231, %v1209, %v1009
        %v1296 = vsel %vm1232, %v1208, %v1010
        %v1297 = vsel %vm1233, %v1209, %v1011
        %v1298 = vsel %vm1234, %v1208, %v1012
        %v1299 = vsel %vm1235, %v1209, %v1013
        %v1300 = vsel %vm1236, %v1208, %v1014
        %v1301 = vsel %vm1237, %v1209, %v1015
        %v1302 = vsel %vm1238, %v1208, %v1016
        %v1303 = vsel %vm1239, %v1209, %v1017
        %v1304 = vsel %vm1240, %v1208, %v1018
        %v1305 = vsel %vm1241, %v1209, %v1019
        %v1306 = vsel %vm1242, %v1208, %v1020
        %v1307 = vsel %vm1243, %v1209, %v1021
        %v1308 = vsel %vm1244, %v1208, %v1022
        %v1309 = vsel %vm1245, %v1209, %v1023
        %v1310 = vsel %vm1246, %v1208, %v1024
        %v1311 = vsel %vm1247, %v1209, %v1025
        %v1312 = vsel %vm1248, %v1208, %v1026
        %v1313 = vsel %vm1249, %v1209, %v1027
        %v1314 = vsel %vm1250, %v1208, %v1028
        %v1315 = vsel %vm1251, %v1209, %v1029
        %v1316 = vsel %vm1252, %v1208, %v1030
        %v1317 = vsel %vm1253, %v1209, %v1031
        %v1318 = vsel %vm1254, %v1208, %v1032
        %v1319 = vsel %vm1255, %v1209, %v1033
        %v1320 = vsel %vm1256, %v1208, %v1034
        %v1321 = vsel %vm1257, %v1209, %v1035
        %v1322 = vsel %vm1258, %v1208, %v1036
        %v1323 = vsel %vm1259, %v1209, %v1037
        %v1324 = vsel %vm1260, %v1208, %v1038
        %v1325 = vsel %vm1261, %v1209, %v1039
        %v1326 = vsel %vm1262, %v1208, %v1040
        %v1327 = vsel %vm1263, %v1209, %v1041
        %v1328 = vsel %vm1264, %v1208, %v1042
        %v1329 = vsel %vm1265, %v1209, %v1043
        %v1330 = vsel %vm1266, %v1208, %v1044
        %v1331 = vsel %vm1267, %v1209, %v1045
        %v1332 = vsel %vm1268, %v1208, %v1046
        %v1333 = vsel %vm1269, %v1209, %v1047
        %v1334 = vsel %vm1270, %v1208, %v1048
        %v1335 = vsel %vm1271, %v1209, %v1049
        %v1336 = vsel %vm1272, %v1208, %v1050
        %v1337 = vsel %vm1273, %v1209, %v1051
        %v1338 = vsel %vm1210, 3e+38, %v1052
        %v1339 = vsel %vm1211, 3e+38, %v1053
        %v1340 = vsel %vm1212, 3e+38, %v1054
        %v1341 = vsel %vm1213, 3e+38, %v1055
        %v1342 = vsel %vm1214, 3e+38, %v1056
        %v1343 = vsel %vm1215, 3e+38, %v1057
        %v1344 = vsel %vm1216, 3e+38, %v1058
        %v1345 = vsel %vm1217, 3e+38, %v1059
        %v1346 = vsel %vm1218, 3e+38, %v1060
        %v1347 = vsel %vm1219, 3e+38, %v1061
        %v1348 = vsel %vm1220, 3e+38, %v1062
        %v1349 = vsel %vm1221, 3e+38, %v1063
        %v1350 = vsel %vm1222, 3e+38, %v1064
        %v1351 = vsel %vm1223, 3e+38, %v1065
        %v1352 = vsel %vm1224, 3e+38, %v1066
        %v1353 = vsel %vm1225, 3e+38, %v1067
        %v1354 = vsel %vm1226, 3e+38, %v1068
        %v1355 = vsel %vm1227, 3e+38, %v1069
        %v1356 = vsel %vm1228, 3e+38, %v1070
        %v1357 = vsel %vm1229, 3e+38, %v1071
        %v1358 = vsel %vm1230, 3e+38, %v1072
        %v1359 = vsel %vm1231, 3e+38, %v1073
        %v1360 = vsel %vm1232, 3e+38, %v1074
        %v1361 = vsel %vm1233, 3e+38, %v1075
        %v1362 = vsel %vm1234, 3e+38, %v1076
        %v1363 = vsel %vm1235, 3e+38, %v1077
        %v1364 = vsel %vm1236, 3e+38, %v1078
        %v1365 = vsel %vm1237, 3e+38, %v1079
        %v1366 = vsel %vm1238, 3e+38, %v1080
        %v1367 = vsel %vm1239, 3e+38, %v1081
        %v1368 = vsel %vm1240, 3e+38, %v1082
        %v1369 = vsel %vm1241, 3e+38, %v1083
        %v1370 = vsel %vm1242, 3e+38, %v1084
        %v1371 = vsel %vm1243, 3e+38, %v1085
        %v1372 = vsel %vm1244, 3e+38, %v1086
        %v1373 = vsel %vm1245, 3e+38, %v1087
        %v1374 = vsel %vm1246, 3e+38, %v1088
        %v1375 = vsel %vm1247, 3e+38, %v1089
        %v1376 = vsel %vm1248, 3e+38, %v1090
        %v1377 = vsel %vm1249, 3e+38, %v1091
        %v1378 = vsel %vm1250, 3e+38, %v1092
        %v1379 = vsel %vm1251, 3e+38, %v1093
        %v1380 = vsel %vm1252, 3e+38, %v1094
        %v1381 = vsel %vm1253, 3e+38, %v1095
        %v1382 = vsel %vm1254, 3e+38, %v1096
        %v1383 = vsel %vm1255, 3e+38, %v1097
        %v1384 = vsel %vm1256, 3e+38, %v1098
        %v1385 = vsel %vm1257, 3e+38, %v1099
        %v1386 = vsel %vm1258, 3e+38, %v1100
        %v1387 = vsel %vm1259, 3e+38, %v1101
        %v1388 = vsel %vm1260, 3e+38, %v1102
        %v1389 = vsel %vm1261, 3e+38, %v1103
        %v1390 = vsel %vm1262, 3e+38, %v1104
        %v1391 = vsel %vm1263, 3e+38, %v1105
        %v1392 = vsel %vm1264, 3e+38, %v1106
        %v1393 = vsel %vm1265, 3e+38, %v1107
        %v1394 = vsel %vm1266, 3e+38, %v1108
        %v1395 = vsel %vm1267, 3e+38, %v1109
        %v1396 = vsel %vm1268, 3e+38, %v1110
        %v1397 = vsel %vm1269, 3e+38, %v1111
        %v1398 = vsel %vm1270, 3e+38, %v1112
        %v1399 = vsel %vm1271, 3e+38, %v1113
        %v1400 = vsel %vm1272, 3e+38, %v1114
        %v1401 = vsel %vm1273, 3e+38, %v1115
        %v1402 = vmin.f32 %v1338, %v1342
        %v1403 = vmin.f32 %v1340, %v1344
        %v1404 = vmin.f32 %v1402, %v1346
        %v1405 = vmin.f32 %v1403, %v1348
        %v1406 = vmin.f32 %v1404, %v1350
        %v1407 = vmin.f32 %v1405, %v1352
        %v1408 = vmin.f32 %v1406, %v1354
        %v1409 = vmin.f32 %v1407, %v1356
        %v1410 = vmin.f32 %v1408, %v1358
        %v1411 = vmin.f32 %v1409, %v1360
        %v1412 = vmin.f32 %v1410, %v1362
        %v1413 = vmin.f32 %v1411, %v1364
        %v1414 = vmin.f32 %v1412, %v1366
        %v1415 = vmin.f32 %v1413, %v1368
        %v1416 = vmin.f32 %v1414, %v1370
        %v1417 = vmin.f32 %v1415, %v1372
        %v1418 = vmin.f32 %v1416, %v1374
        %v1419 = vmin.f32 %v1417, %v1376
        %v1420 = vmin.f32 %v1418, %v1378
        %v1421 = vmin.f32 %v1419, %v1380
        %v1422 = vmin.f32 %v1420, %v1382
        %v1423 = vmin.f32 %v1421, %v1384
        %v1424 = vmin.f32 %v1422, %v1386
        %v1425 = vmin.f32 %v1423, %v1388
        %v1426 = vmin.f32 %v1424, %v1390
        %v1427 = vmin.f32 %v1425, %v1392
        %v1428 = vmin.f32 %v1426, %v1394
        %v1429 = vmin.f32 %v1427, %v1396
        %v1430 = vmin.f32 %v1428, %v1398
        %v1431 = vmin.f32 %v1429, %v1400
        %v1432 = vmin.f32 %v1430, %v1431
        %v1433 = vrot.slane %v1432, 4
        %v1434 = vmin.f32 %v1432, %v1433
        %v1435 = vrot.slane %v1434, 2
        %v1436 = vmin.f32 %v1434, %v1435
        %v1437 = vrot.slane %v1436, 1
        %v1438 = vmin.f32 %v1436, %v1437
        %v1439 = vmin.f32 %v1339, %v1343
        %v1440 = vmin.f32 %v1341, %v1345
        %v1441 = vmin.f32 %v1439, %v1347
        %v1442 = vmin.f32 %v1440, %v1349
        %v1443 = vmin.f32 %v1441, %v1351
        %v1444 = vmin.f32 %v1442, %v1353
        %v1445 = vmin.f32 %v1443, %v1355
        %v1446 = vmin.f32 %v1444, %v1357
        %v1447 = vmin.f32 %v1445, %v1359
        %v1448 = vmin.f32 %v1446, %v1361
        %v1449 = vmin.f32 %v1447, %v1363
        %v1450 = vmin.f32 %v1448, %v1365
        %v1451 = vmin.f32 %v1449, %v1367
        %v1452 = vmin.f32 %v1450, %v1369
        %v1453 = vmin.f32 %v1451, %v1371
        %v1454 = vmin.f32 %v1452, %v1373
        %v1455 = vmin.f32 %v1453, %v1375
        %v1456 = vmin.f32 %v1454, %v1377
        %v1457 = vmin.f32 %v1455, %v1379
        %v1458 = vmin.f32 %v1456, %v1381
        %v1459 = vmin.f32 %v1457, %v1383
        %v1460 = vmin.f32 %v1458, %v1385
        %v1461 = vmin.f32 %v1459, %v1387
        %v1462 = vmin.f32 %v1460, %v1389
        %v1463 = vmin.f32 %v1461, %v1391
        %v1464 = vmin.f32 %v1462, %v1393
        %v1465 = vmin.f32 %v1463, %v1395
        %v1466 = vmin.f32 %v1464, %v1397
        %v1467 = vmin.f32 %v1465, %v1399
        %v1468 = vmin.f32 %v1466, %v1401
        %v1469 = vmin.f32 %v1467, %v1468
        %v1470 = vrot.slane %v1469, 4
        %v1471 = vmin.f32 %v1469, %v1470
        %v1472 = vrot.slane %v1471, 2
        %v1473 = vmin.f32 %v1471, %v1472
        %v1474 = vrot.slane %v1473, 1
        %v1475 = vmin.f32 %v1473, %v1474
        %v1476 = vmax.f32 %v1438, 0.0
        %v1477 = vmax.f32 %v1475, 0.0
        %v1478 = vrsqrt.pop %v1476
        %v1479 = vmul.f32 %v1476, %v1478
        %vm1480 = vcmp.eq.f32.partialorder %v1476, inf
        %v1481 = vsel %vm1480, %v1476, %v1479
        %vm1482 = vcmp.eq.f32.partialorder %v1476, 0.0
        %v1483 = vand.u32 %v1476, 2147483648
        %v1484 = vsel %vm1482, %v1483, %v1481
        %v1485 = vrsqrt.pop %v1477
        %v1486 = vmul.f32 %v1477, %v1485
        %vm1487 = vcmp.eq.f32.partialorder %v1477, inf
        %v1488 = vsel %vm1487, %v1477, %v1486
        %vm1489 = vcmp.eq.f32.partialorder %v1477, 0.0
        %v1490 = vand.u32 %v1477, 2147483648
        %v1491 = vsel %vm1489, %v1490, %v1488
        %v1492 = vadd.f32 %v1484, 1e-10
        %v1493 = vadd.f32 %v1491, 1e-10
        %v1494 = vrcp.pop %v1492
        %v1495 = vrcp.pop %v1493
        %vm1496 = vcmp.le.f32.partialorder %v1338, %v1438
        %vm1497 = vcmp.le.f32.partialorder %v1339, %v1475
        %vm1498 = vcmp.le.f32.partialorder %v1340, %v1438
        %vm1499 = vcmp.le.f32.partialorder %v1341, %v1475
        %vm1500 = vcmp.le.f32.partialorder %v1342, %v1438
        %vm1501 = vcmp.le.f32.partialorder %v1343, %v1475
        %vm1502 = vcmp.le.f32.partialorder %v1344, %v1438
        %vm1503 = vcmp.le.f32.partialorder %v1345, %v1475
        %vm1504 = vcmp.le.f32.partialorder %v1346, %v1438
        %vm1505 = vcmp.le.f32.partialorder %v1347, %v1475
        %vm1506 = vcmp.le.f32.partialorder %v1348, %v1438
        %vm1507 = vcmp.le.f32.partialorder %v1349, %v1475
        %vm1508 = vcmp.le.f32.partialorder %v1350, %v1438
        %vm1509 = vcmp.le.f32.partialorder %v1351, %v1475
        %vm1510 = vcmp.le.f32.partialorder %v1352, %v1438
        %vm1511 = vcmp.le.f32.partialorder %v1353, %v1475
        %vm1512 = vcmp.le.f32.partialorder %v1354, %v1438
        %vm1513 = vcmp.le.f32.partialorder %v1355, %v1475
        %vm1514 = vcmp.le.f32.partialorder %v1356, %v1438
        %vm1515 = vcmp.le.f32.partialorder %v1357, %v1475
        %vm1516 = vcmp.le.f32.partialorder %v1358, %v1438
        %vm1517 = vcmp.le.f32.partialorder %v1359, %v1475
        %vm1518 = vcmp.le.f32.partialorder %v1360, %v1438
        %vm1519 = vcmp.le.f32.partialorder %v1361, %v1475
        %vm1520 = vcmp.le.f32.partialorder %v1362, %v1438
        %vm1521 = vcmp.le.f32.partialorder %v1363, %v1475
        %vm1522 = vcmp.le.f32.partialorder %v1364, %v1438
        %vm1523 = vcmp.le.f32.partialorder %v1365, %v1475
        %vm1524 = vcmp.le.f32.partialorder %v1366, %v1438
        %vm1525 = vcmp.le.f32.partialorder %v1367, %v1475
        %vm1526 = vcmp.le.f32.partialorder %v1368, %v1438
        %vm1527 = vcmp.le.f32.partialorder %v1369, %v1475
        %vm1528 = vcmp.le.f32.partialorder %v1370, %v1438
        %vm1529 = vcmp.le.f32.partialorder %v1371, %v1475
        %vm1530 = vcmp.le.f32.partialorder %v1372, %v1438
        %vm1531 = vcmp.le.f32.partialorder %v1373, %v1475
        %vm1532 = vcmp.le.f32.partialorder %v1374, %v1438
        %vm1533 = vcmp.le.f32.partialorder %v1375, %v1475
        %vm1534 = vcmp.le.f32.partialorder %v1376, %v1438
        %vm1535 = vcmp.le.f32.partialorder %v1377, %v1475
        %vm1536 = vcmp.le.f32.partialorder %v1378, %v1438
        %vm1537 = vcmp.le.f32.partialorder %v1379, %v1475
        %vm1538 = vcmp.le.f32.partialorder %v1380, %v1438
        %vm1539 = vcmp.le.f32.partialorder %v1381, %v1475
        %vm1540 = vcmp.le.f32.partialorder %v1382, %v1438
        %vm1541 = vcmp.le.f32.partialorder %v1383, %v1475
        %vm1542 = vcmp.le.f32.partialorder %v1384, %v1438
        %vm1543 = vcmp.le.f32.partialorder %v1385, %v1475
        %vm1544 = vcmp.le.f32.partialorder %v1386, %v1438
        %vm1545 = vcmp.le.f32.partialorder %v1387, %v1475
        %vm1546 = vcmp.le.f32.partialorder %v1388, %v1438
        %vm1547 = vcmp.le.f32.partialorder %v1389, %v1475
        %vm1548 = vcmp.le.f32.partialorder %v1390, %v1438
        %vm1549 = vcmp.le.f32.partialorder %v1391, %v1475
        %vm1550 = vcmp.le.f32.partialorder %v1392, %v1438
        %vm1551 = vcmp.le.f32.partialorder %v1393, %v1475
        %vm1552 = vcmp.le.f32.partialorder %v1394, %v1438
        %vm1553 = vcmp.le.f32.partialorder %v1395, %v1475
        %vm1554 = vcmp.le.f32.partialorder %v1396, %v1438
        %vm1555 = vcmp.le.f32.partialorder %v1397, %v1475
        %vm1556 = vcmp.le.f32.partialorder %v1398, %v1438
        %vm1557 = vcmp.le.f32.partialorder %v1399, %v1475
        %vm1558 = vcmp.le.f32.partialorder %v1400, %v1438
        %vm1559 = vcmp.le.f32.partialorder %v1401, %v1475
        %v1560 = vsel %vm1496, %v1494, %v1274
        %v1561 = vsel %vm1497, %v1495, %v1275
        %v1562 = vsel %vm1498, %v1494, %v1276
        %v1563 = vsel %vm1499, %v1495, %v1277
        %v1564 = vsel %vm1500, %v1494, %v1278
        %v1565 = vsel %vm1501, %v1495, %v1279
        %v1566 = vsel %vm1502, %v1494, %v1280
        %v1567 = vsel %vm1503, %v1495, %v1281
        %v1568 = vsel %vm1504, %v1494, %v1282
        %v1569 = vsel %vm1505, %v1495, %v1283
        %v1570 = vsel %vm1506, %v1494, %v1284
        %v1571 = vsel %vm1507, %v1495, %v1285
        %v1572 = vsel %vm1508, %v1494, %v1286
        %v1573 = vsel %vm1509, %v1495, %v1287
        %v1574 = vsel %vm1510, %v1494, %v1288
        %v1575 = vsel %vm1511, %v1495, %v1289
        %v1576 = vsel %vm1512, %v1494, %v1290
        %v1577 = vsel %vm1513, %v1495, %v1291
        %v1578 = vsel %vm1514, %v1494, %v1292
        %v1579 = vsel %vm1515, %v1495, %v1293
        %v1580 = vsel %vm1516, %v1494, %v1294
        %v1581 = vsel %vm1517, %v1495, %v1295
        %v1582 = vsel %vm1518, %v1494, %v1296
        %v1583 = vsel %vm1519, %v1495, %v1297
        %v1584 = vsel %vm1520, %v1494, %v1298
        %v1585 = vsel %vm1521, %v1495, %v1299
        %v1586 = vsel %vm1522, %v1494, %v1300
        %v1587 = vsel %vm1523, %v1495, %v1301
        %v1588 = vsel %vm1524, %v1494, %v1302
        %v1589 = vsel %vm1525, %v1495, %v1303
        %v1590 = vsel %vm1526, %v1494, %v1304
        %v1591 = vsel %vm1527, %v1495, %v1305
        %v1592 = vsel %vm1528, %v1494, %v1306
        %v1593 = vsel %vm1529, %v1495, %v1307
        %v1594 = vsel %vm1530, %v1494, %v1308
        %v1595 = vsel %vm1531, %v1495, %v1309
        %v1596 = vsel %vm1532, %v1494, %v1310
        %v1597 = vsel %vm1533, %v1495, %v1311
        %v1598 = vsel %vm1534, %v1494, %v1312
        %v1599 = vsel %vm1535, %v1495, %v1313
        %v1600 = vsel %vm1536, %v1494, %v1314
        %v1601 = vsel %vm1537, %v1495, %v1315
        %v1602 = vsel %vm1538, %v1494, %v1316
        %v1603 = vsel %vm1539, %v1495, %v1317
        %v1604 = vsel %vm1540, %v1494, %v1318
        %v1605 = vsel %vm1541, %v1495, %v1319
        %v1606 = vsel %vm1542, %v1494, %v1320
        %v1607 = vsel %vm1543, %v1495, %v1321
        %v1608 = vsel %vm1544, %v1494, %v1322
        %v1609 = vsel %vm1545, %v1495, %v1323
        %v1610 = vsel %vm1546, %v1494, %v1324
        %v1611 = vsel %vm1547, %v1495, %v1325
        %v1612 = vsel %vm1548, %v1494, %v1326
        %v1613 = vsel %vm1549, %v1495, %v1327
        %v1614 = vsel %vm1550, %v1494, %v1328
        %v1615 = vsel %vm1551, %v1495, %v1329
        %v1616 = vsel %vm1552, %v1494, %v1330
        %v1617 = vsel %vm1553, %v1495, %v1331
        %v1618 = vsel %vm1554, %v1494, %v1332
        %v1619 = vsel %vm1555, %v1495, %v1333
        %v1620 = vsel %vm1556, %v1494, %v1334
        %v1621 = vsel %vm1557, %v1495, %v1335
        %v1622 = vsel %vm1558, %v1494, %v1336
        %v1623 = vsel %vm1559, %v1495, %v1337
        %1624 = vmatprep.subr.mxu0 %v1591
        %1625 = vmatpush1.msra.mxu0 %v1590
        %1626 = vmatprep.subr.mxu0 %v1589
        %1627 = vmatpush1.msra.mxu0 %v1588
        %1628 = vmatprep.subr.mxu0 %v1587
        %1629 = vmatpush1.msra.mxu0 %v1586
        %1630 = vmatprep.subr.mxu0 %v1585
        %1631 = vmatpush1.msra.mxu0 %v1584
        %1632 = vmatprep.subr.mxu0 %v1583
        %1633 = vmatpush1.msra.mxu0 %v1582
        %1634 = vmatprep.subr.mxu0 %v1581
        %1635 = vmatpush1.msra.mxu0 %v1580
        %1636 = vmatprep.subr.mxu0 %v1579
        %1637 = vmatpush1.msra.mxu0 %v1578
        %1638 = vmatprep.subr.mxu0 %v1577
        %1639 = vmatpush1.msra.mxu0 %v1576
        %1640 = vmatprep.subr.mxu0 %v1575
        %1641 = vmatpush1.msra.mxu0 %v1574
        %1642 = vmatprep.subr.mxu0 %v1573
        %1643 = vmatpush1.msra.mxu0 %v1572
        %1644 = vmatprep.subr.mxu0 %v1571
        %1645 = vmatpush1.msra.mxu0 %v1570
        %1646 = vmatprep.subr.mxu0 %v1569
        %1647 = vmatpush1.msra.mxu0 %v1568
        %1648 = vmatprep.subr.mxu0 %v1567
        %1649 = vmatpush1.msra.mxu0 %v1566
        %1650 = vmatprep.subr.mxu0 %v1565
        %1651 = vmatpush1.msra.mxu0 %v1564
        %1652 = vmatprep.subr.mxu0 %v1563
        %1653 = vmatpush1.msra.mxu0 %v1562
        %1654 = vmatprep.subr.mxu0 %v1561
        %1655 = vmatpush1.msra.mxu0 %v1560
        %1656 = vmatprep.subr.mxu0 %v1623
        %1657 = vmatpush2.msra.mxu0 %v1622
        %1658 = vmatprep.subr.mxu0 %v1621
        %1659 = vmatpush2.msra.mxu0 %v1620
        %1660 = vmatprep.subr.mxu0 %v1619
        %1661 = vmatpush2.msra.mxu0 %v1618
        %1662 = vmatprep.subr.mxu0 %v1617
        %1663 = vmatpush2.msra.mxu0 %v1616
        %1664 = vmatprep.subr.mxu0 %v1615
        %1665 = vmatpush2.msra.mxu0 %v1614
        %1666 = vmatprep.subr.mxu0 %v1613
        %1667 = vmatpush2.msra.mxu0 %v1612
        %1668 = vmatprep.subr.mxu0 %v1611
        %1669 = vmatpush2.msra.mxu0 %v1610
        %1670 = vmatprep.subr.mxu0 %v1609
        %1671 = vmatpush2.msra.mxu0 %v1608
        %1672 = vmatprep.subr.mxu0 %v1607
        %1673 = vmatpush2.msra.mxu0 %v1606
        %1674 = vmatprep.subr.mxu0 %v1605
        %1675 = vmatpush2.msra.mxu0 %v1604
        %1676 = vmatprep.subr.mxu0 %v1603
        %1677 = vmatpush2.msra.mxu0 %v1602
        %1678 = vmatprep.subr.mxu0 %v1601
        %1679 = vmatpush2.msra.mxu0 %v1600
        %1680 = vmatprep.subr.mxu0 %v1599
        %1681 = vmatpush2.msra.mxu0 %v1598
        %1682 = vmatprep.subr.mxu0 %v1597
        %1683 = vmatpush2.msra.mxu0 %v1596
        %1684 = vmatprep.subr.mxu0 %v1595
        %1685 = vmatpush2.msra.mxu0 %v1594
        %1686 = vmatprep.subr.mxu0 %v1593
        %1687 = vmatpush2.msra.mxu0 %v1592
        %1688 = vmatprep.mubr.f32.mxu0 %v473
        %1689 = vmatmul.mubr.f32.gmra.mxu0 %v472
        %v1690 = vpop.f32.mrf.mxu0
        %v1691 = vadd.f32 0.0, %v1690
        %v1692 = vpop.f32.mrf.mxu0
        %v1693 = vadd.f32 0.0, %v1692
        %1694 = vdwg.mxu0
        %v1695 = vadd.f32 %v1560, %v1562
        %v1696 = vadd.f32 %v1695, %v1564
        %v1697 = vadd.f32 %v1696, %v1566
        %v1698 = vadd.f32 %v1697, %v1568
        %v1699 = vadd.f32 %v1698, %v1570
        %v1700 = vadd.f32 %v1699, %v1572
        %v1701 = vadd.f32 %v1700, %v1574
        %v1702 = vadd.f32 %v1701, %v1576
        %v1703 = vadd.f32 %v1702, %v1578
        %v1704 = vadd.f32 %v1703, %v1580
        %v1705 = vadd.f32 %v1704, %v1582
        %v1706 = vadd.f32 %v1705, %v1584
        %v1707 = vadd.f32 %v1706, %v1586
        %v1708 = vadd.f32 %v1707, %v1588
        %v1709 = vadd.f32 %v1708, %v1590
        %v1710 = vadd.f32 %v1709, %v1592
        %v1711 = vadd.f32 %v1710, %v1594
        %v1712 = vadd.f32 %v1711, %v1596
        %v1713 = vadd.f32 %v1712, %v1598
        %v1714 = vadd.f32 %v1713, %v1600
        %v1715 = vadd.f32 %v1714, %v1602
        %v1716 = vadd.f32 %v1715, %v1604
        %v1717 = vadd.f32 %v1716, %v1606
        %v1718 = vadd.f32 %v1717, %v1608
        %v1719 = vadd.f32 %v1718, %v1610
        %v1720 = vadd.f32 %v1719, %v1612
        %v1721 = vadd.f32 %v1720, %v1614
        %v1722 = vadd.f32 %v1721, %v1616
        %v1723 = vadd.f32 %v1722, %v1618
        %v1724 = vadd.f32 %v1723, %v1620
        %v1725 = vadd.f32 %v1724, %v1622
        %v1726 = vrot.slane %v1725, 4
        %v1727 = vadd.f32 %v1725, %v1726
        %v1728 = vrot.slane %v1727, 2
        %v1729 = vadd.f32 %v1727, %v1728
        %v1730 = vrot.slane %v1729, 1
        %v1731 = vadd.f32 %v1729, %v1730
        %v1732 = vadd.f32 %v1561, %v1563
        %v1733 = vadd.f32 %v1732, %v1565
        %v1734 = vadd.f32 %v1733, %v1567
        %v1735 = vadd.f32 %v1734, %v1569
        %v1736 = vadd.f32 %v1735, %v1571
        %v1737 = vadd.f32 %v1736, %v1573
        %v1738 = vadd.f32 %v1737, %v1575
        %v1739 = vadd.f32 %v1738, %v1577
        %v1740 = vadd.f32 %v1739, %v1579
        %v1741 = vadd.f32 %v1740, %v1581
        %v1742 = vadd.f32 %v1741, %v1583
        %v1743 = vadd.f32 %v1742, %v1585
        %v1744 = vadd.f32 %v1743, %v1587
        %v1745 = vadd.f32 %v1744, %v1589
        %v1746 = vadd.f32 %v1745, %v1591
        %v1747 = vadd.f32 %v1746, %v1593
        %v1748 = vadd.f32 %v1747, %v1595
        %v1749 = vadd.f32 %v1748, %v1597
        %v1750 = vadd.f32 %v1749, %v1599
        %v1751 = vadd.f32 %v1750, %v1601
        %v1752 = vadd.f32 %v1751, %v1603
        %v1753 = vadd.f32 %v1752, %v1605
        %v1754 = vadd.f32 %v1753, %v1607
        %v1755 = vadd.f32 %v1754, %v1609
        %v1756 = vadd.f32 %v1755, %v1611
        %v1757 = vadd.f32 %v1756, %v1613
        %v1758 = vadd.f32 %v1757, %v1615
        %v1759 = vadd.f32 %v1758, %v1617
        %v1760 = vadd.f32 %v1759, %v1619
        %v1761 = vadd.f32 %v1760, %v1621
        %v1762 = vadd.f32 %v1761, %v1623
        %v1763 = vrot.slane %v1762, 4
        %v1764 = vadd.f32 %v1762, %v1763
        %v1765 = vrot.slane %v1764, 2
        %v1766 = vadd.f32 %v1764, %v1765
        %v1767 = vrot.slane %v1766, 1
        %v1768 = vadd.f32 %v1766, %v1767
        %v1769 = vrcp.pop %v1731
        %v1770 = vrcp.pop %v1768
        %v1771 = vmul.f32 %v1691, %v1769
        %v1772 = vmul.f32 %v1693, %v1770
        %v1773 = vld [vmem:[%s4] sm:$0xff]
        %v1774 = vld [vmem:[%s4 + $0x8] sm:$0xff]
        %v1775 = vld [vmem:[%s5] sm:$0xff]
        %v1776 = vld [vmem:[%s5 + $0x8] sm:$0xff]
        %v1778 = vsel %vm476, %v1775, 0
        %v1781 = vsel %vm476, %v1776, 0
        %1783 = vmatprep.subr.mxu0 0.0
        %1784 = vmatpush1.msra.mxu0 0.0
        %1785 = vmatprep.subr.mxu0 0.0
        %1786 = vmatpush1.msra.mxu0 0.0
        %1787 = vmatprep.subr.mxu0 0.0
        %1788 = vmatpush1.msra.mxu0 0.0
        %1789 = vmatprep.subr.mxu0 0.0
        %1790 = vmatpush1.msra.mxu0 0.0
        %1791 = vmatprep.subr.mxu0 0.0
        %1792 = vmatpush1.msra.mxu0 0.0
        %1793 = vmatprep.subr.mxu0 0.0
        %1794 = vmatpush1.msra.mxu0 0.0
        %1795 = vmatprep.subr.mxu0 0.0
        %1796 = vmatpush1.msra.mxu0 0.0
        %1797 = vmatprep.subr.mxu0 0.0
        %1798 = vmatpush1.msra.mxu0 0.0
        %1799 = vmatprep.subr.mxu0 0.0
        %1800 = vmatpush1.msra.mxu0 0.0
        %1801 = vmatprep.subr.mxu0 0.0
        %1802 = vmatpush1.msra.mxu0 0.0
        %1803 = vmatprep.subr.mxu0 0.0
        %1804 = vmatpush1.msra.mxu0 0.0
        %1805 = vmatprep.subr.mxu0 0.0
        %1806 = vmatpush1.msra.mxu0 0.0
        %1807 = vmatprep.subr.mxu0 0.0
        %1808 = vmatpush1.msra.mxu0 0.0
        %1809 = vmatprep.subr.mxu0 0.0
        %1810 = vmatpush1.msra.mxu0 0.0
        %1811 = vmatprep.subr.mxu0 0.0
        %1812 = vmatpush1.msra.mxu0 0.0
        %1813 = vmatprep.subr.mxu0 %v475
        %1814 = vmatpush1.msra.mxu0 %v474
        %1815 = vmatprep.subr.mxu0 0.0
        %1816 = vmatpush2.msra.mxu0 0.0
        %1817 = vmatprep.subr.mxu0 0.0
        %1818 = vmatpush2.msra.mxu0 0.0
        %1819 = vmatprep.subr.mxu0 0.0
        %1820 = vmatpush2.msra.mxu0 0.0
        %1821 = vmatprep.subr.mxu0 0.0
        %1822 = vmatpush2.msra.mxu0 0.0
        %1823 = vmatprep.subr.mxu0 0.0
        %1824 = vmatpush2.msra.mxu0 0.0
        %1825 = vmatprep.subr.mxu0 0.0
        %1826 = vmatpush2.msra.mxu0 0.0
        %1827 = vmatprep.subr.mxu0 0.0
        %1828 = vmatpush2.msra.mxu0 0.0
        %1829 = vmatprep.subr.mxu0 0.0
        %1830 = vmatpush2.msra.mxu0 0.0
        %1831 = vmatprep.subr.mxu0 0.0
        %1832 = vmatpush2.msra.mxu0 0.0
        %1833 = vmatprep.subr.mxu0 0.0
        %1834 = vmatpush2.msra.mxu0 0.0
        %1835 = vmatprep.subr.mxu0 0.0
        %1836 = vmatpush2.msra.mxu0 0.0
        %1837 = vmatprep.subr.mxu0 0.0
        %1838 = vmatpush2.msra.mxu0 0.0
        %1839 = vmatprep.subr.mxu0 0.0
        %1840 = vmatpush2.msra.mxu0 0.0
        %1841 = vmatprep.subr.mxu0 0.0
        %1842 = vmatpush2.msra.mxu0 0.0
        %1843 = vmatprep.subr.mxu0 0.0
        %1844 = vmatpush2.msra.mxu0 0.0
        %1845 = vmatprep.subr.mxu0 0.0
        %1846 = vmatpush2.msra.mxu0 0.0
        %1847 = vmatprep.mubr.f32.mxu0 0.0
        %1848 = vmatmul.mubr.f32.gmra.mxu0 %v1778
        %v1849 = vpop.f32.mrf.mxu0
        %v1850 = vadd.f32 0.0, %v1849
        %v1851 = vpop.f32.mrf.mxu0
        %v1852 = vadd.f32 0.0, %v1851
        %1853 = vmatprep.mubr.f32.mxu0 0.0
        %1854 = vmatmul.mubr.f32.gmra.mxu0 %v1781
        %v1855 = vpop.f32.mrf.mxu0
        %v1856 = vadd.f32 0.0, %v1855
        %v1857 = vpop.f32.mrf.mxu0
        %v1858 = vadd.f32 0.0, %v1857
        %1859 = vdwg.mxu0
        %v1861 = vsel %vm476, %v1773, 0
        %v1864 = vsel %vm476, %v1774, 0
        %1866 = vmatprep.subr.mxu0 0.0
        %1867 = vmatpush1.msra.mxu0 0.0
        %1868 = vmatprep.subr.mxu0 0.0
        %1869 = vmatpush1.msra.mxu0 0.0
        %1870 = vmatprep.subr.mxu0 0.0
        %1871 = vmatpush1.msra.mxu0 0.0
        %1872 = vmatprep.subr.mxu0 0.0
        %1873 = vmatpush1.msra.mxu0 0.0
        %1874 = vmatprep.subr.mxu0 0.0
        %1875 = vmatpush1.msra.mxu0 0.0
        %1876 = vmatprep.subr.mxu0 0.0
        %1877 = vmatpush1.msra.mxu0 0.0
        %1878 = vmatprep.subr.mxu0 0.0
        %1879 = vmatpush1.msra.mxu0 0.0
        %1880 = vmatprep.subr.mxu0 0.0
        %1881 = vmatpush1.msra.mxu0 0.0
        %1882 = vmatprep.subr.mxu0 0.0
        %1883 = vmatpush1.msra.mxu0 0.0
        %1884 = vmatprep.subr.mxu0 0.0
        %1885 = vmatpush1.msra.mxu0 0.0
        %1886 = vmatprep.subr.mxu0 0.0
        %1887 = vmatpush1.msra.mxu0 0.0
        %1888 = vmatprep.subr.mxu0 0.0
        %1889 = vmatpush1.msra.mxu0 0.0
        %1890 = vmatprep.subr.mxu0 0.0
        %1891 = vmatpush1.msra.mxu0 0.0
        %1892 = vmatprep.subr.mxu0 0.0
        %1893 = vmatpush1.msra.mxu0 0.0
        %1894 = vmatprep.subr.mxu0 0.0
        %1895 = vmatpush1.msra.mxu0 0.0
        %1896 = vmatprep.subr.mxu0 %v1772
        %1897 = vmatpush1.msra.mxu0 %v1771
        %1898 = vmatprep.subr.mxu0 0.0
        %1899 = vmatpush2.msra.mxu0 0.0
        %1900 = vmatprep.subr.mxu0 0.0
        %1901 = vmatpush2.msra.mxu0 0.0
        %1902 = vmatprep.subr.mxu0 0.0
        %1903 = vmatpush2.msra.mxu0 0.0
        %1904 = vmatprep.subr.mxu0 0.0
        %1905 = vmatpush2.msra.mxu0 0.0
        %1906 = vmatprep.subr.mxu0 0.0
        %1907 = vmatpush2.msra.mxu0 0.0
        %1908 = vmatprep.subr.mxu0 0.0
        %1909 = vmatpush2.msra.mxu0 0.0
        %1910 = vmatprep.subr.mxu0 0.0
        %1911 = vmatpush2.msra.mxu0 0.0
        %1912 = vmatprep.subr.mxu0 0.0
        %1913 = vmatpush2.msra.mxu0 0.0
        %1914 = vmatprep.subr.mxu0 0.0
        %1915 = vmatpush2.msra.mxu0 0.0
        %1916 = vmatprep.subr.mxu0 0.0
        %1917 = vmatpush2.msra.mxu0 0.0
        %1918 = vmatprep.subr.mxu0 0.0
        %1919 = vmatpush2.msra.mxu0 0.0
        %1920 = vmatprep.subr.mxu0 0.0
        %1921 = vmatpush2.msra.mxu0 0.0
        %1922 = vmatprep.subr.mxu0 0.0
        %1923 = vmatpush2.msra.mxu0 0.0
        %1924 = vmatprep.subr.mxu0 0.0
        %1925 = vmatpush2.msra.mxu0 0.0
        %1926 = vmatprep.subr.mxu0 0.0
        %1927 = vmatpush2.msra.mxu0 0.0
        %1928 = vmatprep.subr.mxu0 0.0
        %1929 = vmatpush2.msra.mxu0 0.0
        %1930 = vmatprep.mubr.f32.mxu0 0.0
        %1931 = vmatmul.mubr.f32.gmra.mxu0 %v1861
        %v1932 = vpop.f32.mrf.mxu0
        %v1933 = vadd.f32 %v1850, %v1932
        %v1934 = vpop.f32.mrf.mxu0
        %v1935 = vadd.f32 %v1852, %v1934
        %1936 = vmatprep.mubr.f32.mxu0 0.0
        %1937 = vmatmul.mubr.f32.gmra.mxu0 %v1864
        %v1938 = vpop.f32.mrf.mxu0
        %v1939 = vadd.f32 %v1856, %v1938
        %v1940 = vpop.f32.mrf.mxu0
        %v1941 = vadd.f32 %v1858, %v1940
        %1942 = vdwg.mxu0
        %v1943 = vld [vmem:[%s6] sm:$0xff]
        %v1944 = vld [vmem:[%s6 + $0x8] sm:$0xff]
        %1946 = vset.pattern.permute.xlu0 0
        %1947 = vperm.xlu0 %1946, %v1943
        %v1948 = vpop.permute.xlu0 %1947
        %1951 = vset.pattern.permute.xlu0 0
        %1952 = vperm.xlu0 %1951, %v1944
        %v1953 = vpop.permute.xlu0 %1952
        %v1955 = vadd.f32 %v1933, %v1948
        %v1956 = vadd.f32 %v1935, %v1948
        %v1957 = vadd.f32 %v1939, %v1953
        %v1958 = vadd.f32 %v1941, %v1953
        %v1959 = vmax.f32 %v1955, 0.0
        %v1960 = vmax.f32 %v1956, 0.0
        %v1961 = vmax.f32 %v1957, 0.0
        %v1962 = vmax.f32 %v1958, 0.0
        %v1963 = vld [vmem:[%s7] sm:$0xff]
        %v1964 = vld [vmem:[%s7 + $0x8] sm:$0xff]
        %v1965 = vld [vmem:[%s7 + $0x10] sm:$0xff]
        %v1966 = vld [vmem:[%s7 + $0x18] sm:$0xff]
        %v1967 = vld [vmem:[%s8] sm:$0xff]
        %v1968 = vld [vmem:[%s8 + $0x8] sm:$0xff]
        %v1969 = vld [vmem:[%s8 + $0x10] sm:$0xff]
        %v1970 = vld [vmem:[%s8 + $0x18] sm:$0xff]
        %1972 = vset.pattern.permute.xlu0 0
        %1973 = vperm.xlu0 %1972, %v1967
        %v1974 = vpop.permute.xlu0 %1973
        %1977 = vset.pattern.permute.xlu0 0
        %1978 = vperm.xlu0 %1977, %v1968
        %v1979 = vpop.permute.xlu0 %1978
        %1982 = vset.pattern.permute.xlu0 0
        %1983 = vperm.xlu0 %1982, %v1969
        %v1984 = vpop.permute.xlu0 %1983
        %1987 = vset.pattern.permute.xlu0 0
        %1988 = vperm.xlu0 %1987, %v1970
        %v1989 = vpop.permute.xlu0 %1988
        %vm1991 = vcmask 130048
        %v1993 = vsel %vm1991, %v1963, 0
        %v1996 = vsel %vm1991, %v1964, 0
        %v1999 = vsel %vm1991, %v1965, 0
        %v2002 = vsel %vm1991, %v1966, 0
        %2004 = vmatprep.subr.mxu0 0.0
        %2005 = vmatpush1.msra.mxu0 0.0
        %2006 = vmatprep.subr.mxu0 0.0
        %2007 = vmatpush1.msra.mxu0 0.0
        %2008 = vmatprep.subr.mxu0 0.0
        %2009 = vmatpush1.msra.mxu0 0.0
        %2010 = vmatprep.subr.mxu0 0.0
        %2011 = vmatpush1.msra.mxu0 0.0
        %2012 = vmatprep.subr.mxu0 0.0
        %2013 = vmatpush1.msra.mxu0 0.0
        %2014 = vmatprep.subr.mxu0 0.0
        %2015 = vmatpush1.msra.mxu0 0.0
        %2016 = vmatprep.subr.mxu0 0.0
        %2017 = vmatpush1.msra.mxu0 0.0
        %2018 = vmatprep.subr.mxu0 0.0
        %2019 = vmatpush1.msra.mxu0 0.0
        %2020 = vmatprep.subr.mxu0 0.0
        %2021 = vmatpush1.msra.mxu0 0.0
        %2022 = vmatprep.subr.mxu0 0.0
        %2023 = vmatpush1.msra.mxu0 0.0
        %2024 = vmatprep.subr.mxu0 0.0
        %2025 = vmatpush1.msra.mxu0 0.0
        %2026 = vmatprep.subr.mxu0 0.0
        %2027 = vmatpush1.msra.mxu0 0.0
        %2028 = vmatprep.subr.mxu0 0.0
        %2029 = vmatpush1.msra.mxu0 0.0
        %2030 = vmatprep.subr.mxu0 0.0
        %2031 = vmatpush1.msra.mxu0 0.0
        %2032 = vmatprep.subr.mxu0 %v1962
        %2033 = vmatpush1.msra.mxu0 %v1961
        %2034 = vmatprep.subr.mxu0 %v1960
        %2035 = vmatpush1.msra.mxu0 %v1959
        %2036 = vmatprep.subr.mxu0 0.0
        %2037 = vmatpush2.msra.mxu0 0.0
        %2038 = vmatprep.subr.mxu0 0.0
        %2039 = vmatpush2.msra.mxu0 0.0
        %2040 = vmatprep.subr.mxu0 0.0
        %2041 = vmatpush2.msra.mxu0 0.0
        %2042 = vmatprep.subr.mxu0 0.0
        %2043 = vmatpush2.msra.mxu0 0.0
        %2044 = vmatprep.subr.mxu0 0.0
        %2045 = vmatpush2.msra.mxu0 0.0
        %2046 = vmatprep.subr.mxu0 0.0
        %2047 = vmatpush2.msra.mxu0 0.0
        %2048 = vmatprep.subr.mxu0 0.0
        %2049 = vmatpush2.msra.mxu0 0.0
        %2050 = vmatprep.subr.mxu0 0.0
        %2051 = vmatpush2.msra.mxu0 0.0
        %2052 = vmatprep.subr.mxu0 0.0
        %2053 = vmatpush2.msra.mxu0 0.0
        %2054 = vmatprep.subr.mxu0 0.0
        %2055 = vmatpush2.msra.mxu0 0.0
        %2056 = vmatprep.subr.mxu0 0.0
        %2057 = vmatpush2.msra.mxu0 0.0
        %2058 = vmatprep.subr.mxu0 0.0
        %2059 = vmatpush2.msra.mxu0 0.0
        %2060 = vmatprep.subr.mxu0 0.0
        %2061 = vmatpush2.msra.mxu0 0.0
        %2062 = vmatprep.subr.mxu0 0.0
        %2063 = vmatpush2.msra.mxu0 0.0
        %2064 = vmatprep.subr.mxu0 0.0
        %2065 = vmatpush2.msra.mxu0 0.0
        %2066 = vmatprep.subr.mxu0 0.0
        %2067 = vmatpush2.msra.mxu0 0.0
        %2068 = vmatprep.mubr.f32.mxu0 0.0
        %2069 = vmatmul.mubr.f32.gmra.mxu0 %v1993
        %v2070 = vpop.f32.mrf.mxu0
        %v2071 = vadd.f32 %v1974, %v2070
        %v2072 = vpop.f32.mrf.mxu0
        %v2073 = vadd.f32 %v1974, %v2072
        %2074 = vmatprep.mubr.f32.mxu0 0.0
        %2075 = vmatmul.mubr.f32.gmra.mxu0 %v1996
        %v2076 = vpop.f32.mrf.mxu0
        %v2077 = vadd.f32 %v1979, %v2076
        %v2078 = vpop.f32.mrf.mxu0
        %v2079 = vadd.f32 %v1979, %v2078
        %2080 = vmatprep.mubr.f32.mxu0 0.0
        %2081 = vmatmul.mubr.f32.gmra.mxu0 %v1999
        %v2082 = vpop.f32.mrf.mxu0
        %v2083 = vadd.f32 %v1984, %v2082
        %v2084 = vpop.f32.mrf.mxu0
        %v2085 = vadd.f32 %v1984, %v2084
        %2086 = vmatprep.mubr.f32.mxu0 0.0
        %2087 = vmatmul.mubr.f32.gmra.mxu0 %v2002
        %v2088 = vpop.f32.mrf.mxu0
        %v2089 = vadd.f32 %v1989, %v2088
        %v2090 = vpop.f32.mrf.mxu0
        %v2091 = vadd.f32 %v1989, %v2090
        %2092 = vdwg.mxu0
        %v2093 = vmax.f32 %v2071, 0.0
        %v2094 = vmax.f32 %v2073, 0.0
        %v2095 = vmax.f32 %v2077, 0.0
        %v2096 = vmax.f32 %v2079, 0.0
        %v2097 = vmax.f32 %v2083, 0.0
        %v2098 = vmax.f32 %v2085, 0.0
        %v2099 = vmax.f32 %v2089, 0.0
        %v2100 = vmax.f32 %v2091, 0.0
        %2101 = vst [vmem:[%s406] sm:$0xff] %v2093
        %2102 = vst [vmem:[%s406 + $0x8] sm:$0xff] %v2094
        %2103 = vst [vmem:[%s406 + $0x10] sm:$0xff] %v2095
        %2104 = vst [vmem:[%s406 + $0x18] sm:$0xff] %v2096
        %2105 = vst [vmem:[%s406 + $0x20] sm:$0xff] %v2097
        %2106 = vst [vmem:[%s406 + $0x28] sm:$0xff] %v2098
        %2107 = vst [vmem:[%s406 + $0x30] sm:$0xff] %v2099
        %2108 = vst [vmem:[%s406 + $0x38] sm:$0xff] %v2100
        %s2109 = sand.u32 %s258, 1
        %s2110 = scalar_lea.sflag [#allocation3], %s2109
        %s2111 = sand.u32 %s258, 1
        %s2112 = smul.addr %s2111, 64
        %s2113 = scalar_lea.vmem [#allocation2], %s2112
        // Predicated region
        $region57: #{tpu_custom_call.1} parent=55 // pred_check
          %p2114 = pneg %p268
        $region58: #{tpu_custom_call.1} parent=55 // pred_check_branch
          %2116 = sbr.rel (%p2114) target = $region60
        $region59: #{tpu_custom_call.1} parent=55 // pred_region
          %s2117 = smul.u32 2, %s28
          %s2119 = ssub.s32 1024, 1024
          %2120 = vsyncadd %s2110, %s2119
          %s2121 = smul.addr %s27, 8
          %s2122 = sadd.s32 %s2117, %s2121
          %s2123 = smul.addr %s2122, 128
          %s2124 = scalar_lea.hbm %s9, %s2123
          %s2125 = sshll.u32 %s2113, 4
          %s2126 = int_to_ptr.vmem [resolvable:$true] %s2125
          %2131 = dma.vmem_to_hbm [thread:$0]  %s2126, 1024, %s2124, %s2110, 256, 256, 16
        $region60: #{tpu_custom_call.1} parent=55 // pred_fallthru
          _
      $region56: #{tpu_custom_call.1} parent=5 // pred_fallthru
        _
      %p2132 = scmp.le.s32.totalorder 2, %s18
      // Predicated region
      $region61: #{tpu_custom_call.1} parent=5 // pred_check
        %p2133 = pneg %p2132
      $region62: #{tpu_custom_call.1} parent=5 // pred_check_branch
        %2135 = sbr.rel (%p2133) target = $region64
      $region63: #{tpu_custom_call.1} parent=5 // pred_region
        %s2136 = ssub.s32 %s18, 2
        // Predicated region
        $region65: #{tpu_custom_call.1} parent=63 // pred_check
          %p2137 = pneg %p274
        $region66: #{tpu_custom_call.1} parent=63 // pred_check_branch
          %2139 = sbr.rel (%p2137) target = $region68
        $region67: #{tpu_custom_call.1} parent=63 // pred_region
          %s2140 = sand.u32 %s259, 1
          %s2141 = scalar_lea.sflag [#allocation3], %s2140
          %s2142 = sand.u32 %s259, 1
          %s2143 = smul.addr %s2142, 64
          %s2144 = scalar_lea.vmem [#allocation2], %s2143
          %2145 = dma.done %s2141, 1024
        $region68: #{tpu_custom_call.1} parent=63 // pred_fallthru
          _
      $region64: #{tpu_custom_call.1} parent=5 // pred_fallthru
        _
    $region6: #{tpu_custom_call.1} parent=1 // loop_footer
      %s22 = sadd.s32 1, %s18
    $region7: #{tpu_custom_call.1} parent=1 // loop_footer_branch
      %17 = sbr.rel target = $region3
    $region8: #{tpu_custom_call.1} parent=1 // loop_exit
      _
    %2146 = vsyncpa [#allocation3], 1
    %s2147 = scalar_lea.sflag [#allocation3], 1
    %2148 = vsyncpa %s2147, 1

</llo_original>
